<compile_context>
chip_gen: v7x
topology: tpu7x:2x2x1
jax: 0.10.0
libtpu: 0.0.40
codegen_flags: <defaults>
</compile_context>

<pallas_src>
import functools

import numpy as np
import jax
import jax.numpy as jnp
from jax.experimental import pallas as pl
from jax.experimental.pallas import tpu as pltpu


# ----------------------------------------------------------------------------
# Fused whole-encoder Pallas kernel (grid axis = layer index)
# ----------------------------------------------------------------------------
def _encoder_kernel(x_ref, mask_ref, ext_ref, wqkv_ref, vecs_ref,
                    w1_ref, w2_ref, out_ref, attn_ref,
                    *, scale, out_feature, d_model, ffn_dim):
    layer = pl.program_id(0)

    # Activation carry lives in the output block itself: its block index is
    # constant along the (arbitrary) layer axis, so it stays VMEM-resident
    # across the whole stack and is written back to HBM exactly once.
    @pl.when(layer == 0)
    def _():
        out_ref[...] = x_ref[...]

    x = out_ref[...]                                   # (N, D) f32 carry
    xb = x.astype(jnp.bfloat16)

    # Coalesced per-layer small vectors (one DMA instead of seven).
    vec = vecs_ref[0]                                  # (8, K) f32
    blf  = vec[0:1, :d_model]
    ln1w = vec[1:2, :d_model]
    ln1b = vec[2:3, :d_model]
    b1   = vec[3:4, :ffn_dim]
    b2   = vec[4:5, :d_model]
    ln2w = vec[5:6, :d_model]
    ln2b = vec[6:7, :d_model]

    # ---- MultiHeadAttention -------------------------------------------------
    # Fused projection [Wq | Wk | Wv@Wlf] (linear_final folded into V):
    # one (N,D)x(D,3*OUT) bf16 matmul, f32 accumulation.
    qkv = jnp.dot(xb, wqkv_ref[0], preferred_element_type=jnp.float32)
    q = qkv[:, :out_feature]
    k = qkv[:, out_feature:2 * out_feature]
    vproj = qkv[:, 2 * out_feature:]                   # == x @ (Wv @ Wlf)

    # Reference view(B*H, L//H, OUT) + bmm + softmax(dim=2) + bmm ==
    # block-diagonal-masked attention on (N, N).  mask_ref is a hoisted
    # additive constant: 0 inside a head-chunk, -1e30 elsewhere.
    s = jax.lax.dot_general(q.astype(jnp.bfloat16), k.astype(jnp.bfloat16),
                            (((1,), (1,)), ((), ())),
                            preferred_element_type=jnp.float32)
    s = s * scale + mask_ref[...]
    s = s - jnp.max(s, axis=-1, keepdims=True)
    p = jnp.exp(s)                                     # masked entries -> exact 0
    p = p * pl.reciprocal(jnp.sum(p, axis=-1, keepdims=True), approx=True)
    # Cast AFTER exp/normalize: the selector matmul below relies on masked
    # probabilities being EXACTLY zero, and exact zeros survive the bf16 cast.
    pb = p.astype(jnp.bfloat16)

    # Emit only the per-head diagonal blocks, packed lane-dense (128 lanes):
    # attn[r, j] = p[r, (r//chunk)*chunk + j]  via a 0/1 selector matmul.
    attn_ref[0] = jnp.dot(pb, ext_ref[...], preferred_element_type=jnp.float32)

    # context @ Wlf already folded into vproj -> single matmul + bias.
    o = jnp.dot(pb, vproj.astype(jnp.bfloat16),
                preferred_element_type=jnp.float32) + blf

    # residual + LayerNorm (two-pass form for numerical robustness).
    h = x + o
    mu = jnp.mean(h, axis=-1, keepdims=True)
    hc = h - mu
    var = jnp.mean(hc * hc, axis=-1, keepdims=True)
    h = hc * jax.lax.rsqrt(var + 1e-5) * ln1w + ln1b

    # ---- Position-wise FFN (1x1 convs == matmuls) ---------------------------
    a = jnp.dot(h.astype(jnp.bfloat16), w1_ref[0],
                preferred_element_type=jnp.float32) + b1
    a = jnp.maximum(a, 0.0)
    f = jnp.dot(a.astype(jnp.bfloat16), w2_ref[0],
                preferred_element_type=jnp.float32) + b2

    z = h + f
    mu2 = jnp.mean(z, axis=-1, keepdims=True)
    zc = z - mu2
    var2 = jnp.mean(zc * zc, axis=-1, keepdims=True)
    out_ref[...] = zc * jax.lax.rsqrt(var2 + 1e-5) * ln2w + ln2b   # carry


def encoder_pallas(x2d, stacked, mask_add, ext, *, scale, out_feature,
                   num_layers):
    """Full encoder stack on flattened (N=B*L, D) activations."""
    N, D = x2d.shape
    F = stacked["w1"].shape[-1]
    K = stacked["vecs"].shape[-1]
    EW = ext.shape[-1]

    def const2(shape):                       # layer-invariant operand
        return pl.BlockSpec(shape, lambda l: (0, 0))

    def layer3(shape):                       # (1, a, b) block of layer l
        return pl.BlockSpec((1,) + shape, lambda l: (l, 0, 0))

    kernel = functools.partial(_encoder_kernel, scale=scale,
                               out_feature=out_feature, d_model=D, ffn_dim=F)

    out, attn = pl.pallas_call(
        kernel,
        grid=(num_layers,),
        in_specs=[const2((N, D)),                         # x (layer-0 init)
                  const2((N, N)),                         # additive block mask
                  const2((N, EW)),                        # diag selector (bf16)
                  layer3((D, 3 * out_feature)),           # [Wq|Wk|Wv@Wlf] bf16
                  layer3((8, K)),                         # coalesced biases/LN
                  layer3((D, F)),                         # ffn w1 (bf16)
                  layer3((F, D))],                        # ffn w2 (bf16)
        out_specs=(const2((N, D)),                        # VMEM-resident carry
                   layer3((N, EW))),
        out_shape=(jax.ShapeDtypeStruct((N, D), jnp.float32),
                   jax.ShapeDtypeStruct((num_layers, N, EW), jnp.float32)),
        compiler_params=pltpu.CompilerParams(
            dimension_semantics=("arbitrary",)),          # layer carry
    )(x2d, mask_add, ext, stacked["wqkv"], stacked["vecs"],
      stacked["w1"], stacked["w2"])
    return out, attn


# ----------------------------------------------------------------------------
# Glue: positional encoding table (parameter setup / gather only)
# ----------------------------------------------------------------------------
def positional_encoding_table(d_model, max_seq_len):
    pe = np.array([[pos / np.power(10000, 2.0 * (j // 2) / d_model)
                    for j in range(d_model)] for pos in range(max_seq_len)])
    pe[:, 0::2] = np.sin(pe[:, 0::2])
    pe[:, 1::2] = np.cos(pe[:, 1::2])
    table = np.concatenate([np.zeros((1, d_model)), pe], axis=0)
    return jnp.asarray(table, jnp.float32)


# ----------------------------------------------------------------------------
# Pure-JAX reference mirroring the PyTorch graph exactly (f32, for verification)
# ----------------------------------------------------------------------------
def _ln(x, w, b, eps=1e-5):
    mu = jnp.mean(x, axis=-1, keepdims=True)
    var = jnp.mean((x - mu) ** 2, axis=-1, keepdims=True)
    return (x - mu) / jnp.sqrt(var + eps) * w + b


def encoder_layer_ref(x3d, p, *, num_heads, out_feature):
    B, L, D = x3d.shape
    q = x3d @ p["wq"]
    k = x3d @ p["wk"]
    v = x3d @ p["wv"]
    c = L // num_heads
    q = q.reshape(B * num_heads, c, out_feature)
    k = k.reshape(B * num_heads, c, out_feature)
    v = v.reshape(B * num_heads, c, out_feature)
    scale = (out_feature // num_heads) ** (-0.5)
    s = jnp.einsum("bij,bkj->bik", q, k) * scale
    attn = jax.nn.softmax(s, axis=2)
    ctx = jnp.einsum("bik,bkd->bid", attn, v).reshape(B, -1, D)
    o = ctx @ p["wlf"] + p["blf"][0]
    h = _ln(x3d + o, p["ln1w"][0], p["ln1b"][0])
    a = jnp.maximum(h @ p["w1"] + p["b1"][0], 0.0)
    f = a @ p["w2"] + p["b2"][0]
    out = _ln(h + f, p["ln2w"][0], p["ln2b"][0])
    return out, attn


# ----------------------------------------------------------------------------
if __name__ == "__main__":
    B, L, D, H, FFN, NUM_LAYERS = 2, 16, 256, 8, 512, 2
    OUT_FEATURE = 256            # EncoderLayer default; must equal D for the
                                 # reference residual/reshape to be well formed
    MAX_SEQ_LEN = L
    scale = (OUT_FEATURE // H) ** (-0.5)
    chunk = L // H               # reference "head" = chunk of L//H sequence rows
    N = B * L
    BH = B * H
    EXT_W = 128                  # lane-dense packing width for attention output
    VEC_K = max(D, FFN)          # coalesced small-vector lane width (512)

    key = jax.random.PRNGKey(0)
    key, k_in = jax.random.split(key)
    inputs = jax.random.normal(k_in, (B, L, D), dtype=jnp.float32)
    inputs_len = [L, L - 4]      # per-example lengths; max == L

    # positional embedding (glue, matches PositionalEncoding.forward)
    pe_table = positional_encoding_table(D, MAX_SEQ_LEN)
    pos = np.zeros((B, L), dtype=np.int32)
    for b, ln_b in enumerate(inputs_len):
        pos[b, :ln_b] = np.arange(1, ln_b + 1)
    pos_emb = pe_table[jnp.asarray(pos)]                    # (B, L, D)
    output = inputs + pos_emb

    # TODO(synk): padding_mask(inputs, inputs) is computed by the reference but
    # never reaches attention (EncoderLayer drops attn_mask); intentionally omitted.

    # deterministic per-layer parameters (f32 master copies)
    layer_params = []
    for _ in range(NUM_LAYERS):
        key, *ks = jax.random.split(key, 10)
        layer_params.append({
            "wq":  0.05 * jax.random.normal(ks[0], (D, OUT_FEATURE), jnp.float32),
            "wk":  0.05 * jax.random.normal(ks[1], (D, OUT_FEATURE), jnp.float32),
            "wv":  0.05 * jax.random.normal(ks[2], (D, OUT_FEATURE), jnp.float32),
            "wlf": 0.05 * jax.random.normal(ks[3], (D, D), jnp.float32),   # linear_final W^T
            "blf": 0.01 * jax.random.normal(ks[4], (1, D), jnp.float32),
            "ln1w": jnp.ones((1, D), jnp.float32),
            "ln1b": jnp.zeros((1, D), jnp.float32),
            "w1":  0.05 * jax.random.normal(ks[5], (D, FFN), jnp.float32), # conv1 (F,D,1)->(D,F)
            "b1":  0.01 * jax.random.normal(ks[6], (1, FFN), jnp.float32),
            "w2":  0.05 * jax.random.normal(ks[7], (FFN, D), jnp.float32), # conv2 (D,F,1)->(F,D)
            "b2":  0.01 * jax.random.normal(ks[8], (1, D), jnp.float32),
            "ln2w": jnp.ones((1, D), jnp.float32),
            "ln2b": jnp.zeros((1, D), jnp.float32),
        })

    # Stack per-layer weights on a leading layer axis.  Big matrices in bf16
    # (MXU inputs); linear_final is folded into the value projection offline
    # (Wv @ Wlf computed in f32, then cast); the seven small f32 vectors are
    # coalesced into one (NUM_LAYERS, 8, VEC_K) array -> one DMA per layer.
    def pack_vecs(p):
        v = np.zeros((8, VEC_K), np.float32)
        v[0, :D]   = np.asarray(p["blf"])[0]
        v[1, :D]   = np.asarray(p["ln1w"])[0]
        v[2, :D]   = np.asarray(p["ln1b"])[0]
        v[3, :FFN] = np.asarray(p["b1"])[0]
        v[4, :D]   = np.asarray(p["b2"])[0]
        v[5, :D]   = np.asarray(p["ln2w"])[0]
        v[6, :D]   = np.asarray(p["ln2b"])[0]
        return v

    stacked = {
        "wqkv": jnp.stack([jnp.concatenate(
                              [p["wq"], p["wk"], p["wv"] @ p["wlf"]], axis=1)
                           for p in layer_params]).astype(jnp.bfloat16),
        "vecs": jnp.asarray(np.stack([pack_vecs(p) for p in layer_params])),
        "w1":   jnp.stack([p["w1"] for p in layer_params]).astype(jnp.bfloat16),
        "w2":   jnp.stack([p["w2"] for p in layer_params]).astype(jnp.bfloat16),
    }

    # Hoisted constants: additive block-diagonal mask (f32, added to f32
    # scores) and the diagonal-block column selector (0/1, bf16 MXU input),
    # padded to 128 lanes for dense stores.
    ridx = np.arange(N)
    same_block = (ridx[:, None] // chunk) == (ridx[None, :] // chunk)
    mask_add = jnp.asarray(np.where(same_block, 0.0, -1e30), jnp.float32)   # (N, N)
    ext = jnp.asarray((np.arange(EXT_W)[None, :] ==
                       (ridx % chunk)[:, None]).astype(np.float32),
                      jnp.bfloat16)                                          # (N, 128)

    # ---- Pallas encoder (single fused call over all layers) ----
    x2d = output.reshape(N, D)
    enc2d, attn_packed = encoder_pallas(
        x2d, stacked, mask_add, ext,
        scale=scale, out_feature=OUT_FEATURE, num_layers=NUM_LAYERS)
    enc_out = enc2d.reshape(B, L, D)
    # (NUM_LAYERS, N, 128) -> per-head attention (NUM_LAYERS, B*H, chunk, chunk)
    attentions = attn_packed[:, :, :chunk].reshape(NUM_LAYERS, BH, chunk, chunk)
    jax.block_until_ready(enc_out)
    jax.block_until_ready(attentions)

    # ---- verify against a pure-JAX f32 reference of the PyTorch graph ----
    ref = output
    ref_attns = []
    for p in layer_params:
        ref, ref_attn = encoder_layer_ref(ref, p, num_heads=H,
                                          out_feature=OUT_FEATURE)
        ref_attns.append(ref_attn)
    ref_attns = jnp.stack(ref_attns)

    # Tolerances account for the deliberate bf16 weight/activation casts at
    # every MXU input and the folded (Wv @ Wlf) bf16 composition (the
    # reference is pure f32); approx reciprocal adds ~1e-3 relative on attn.
    np.testing.assert_allclose(np.asarray(enc_out), np.asarray(ref),
                               rtol=1.5e-1, atol=1.5e-1)
    np.testing.assert_allclose(np.asarray(attentions), np.asarray(ref_attns),
                               rtol=0.0, atol=8e-2)
    print("KERNEL_OK")
</pallas_src>

<mosaic_0001>
module attributes {stable_mosaic.version = 11 : i64} {
  func.func @_encoder_kernel(%arg0: i32, %arg1: memref<32x256xf32, #tpu.memory_space<vmem>>, %arg2: memref<32x32xf32, #tpu.memory_space<vmem>>, %arg3: memref<32x128xbf16, #tpu.memory_space<vmem>>, %arg4: memref<1x256x768xbf16, #tpu.memory_space<vmem>>, %arg5: memref<1x8x512xf32, #tpu.memory_space<vmem>>, %arg6: memref<1x256x512xbf16, #tpu.memory_space<vmem>>, %arg7: memref<1x512x256xbf16, #tpu.memory_space<vmem>>, %arg8: memref<32x256xf32, #tpu.memory_space<vmem>>, %arg9: memref<1x32x128xf32, #tpu.memory_space<vmem>>) attributes {dimension_semantics = [#tpu.dimension_semantics<arbitrary>], iteration_bounds = array<i64: 2>, scalar_prefetch = 0 : i64, scratch_operands = 0 : i64, tpu.core_type = #tpu.core_type<tc>, window_params = [{pipeline_mode = #tpu.pipeline_mode<synchronous>, transform_indices = @transform_0, window_bounds = array<i64: 32, 256>}, {pipeline_mode = #tpu.pipeline_mode<synchronous>, transform_indices = @transform_1, window_bounds = array<i64: 32, 32>}, {pipeline_mode = #tpu.pipeline_mode<synchronous>, transform_indices = @transform_2, window_bounds = array<i64: 32, 128>}, {transform_indices = @transform_3, window_bounds = array<i64: 1, 256, 768>}, {transform_indices = @transform_4, window_bounds = array<i64: 1, 8, 512>}, {transform_indices = @transform_5, window_bounds = array<i64: 1, 256, 512>}, {transform_indices = @transform_6, window_bounds = array<i64: 1, 512, 256>}, {pipeline_mode = #tpu.pipeline_mode<synchronous>, transform_indices = @transform_7, window_bounds = array<i64: 32, 256>}, {transform_indices = @transform_8, window_bounds = array<i64: 1, 32, 128>}]} {
    %c0_i32 = arith.constant 0 : i32
    %0 = arith.cmpi eq, %arg0, %c0_i32 : i32
    %1 = arith.extui %0 : i1 to i32
    %c0_i32_0 = arith.constant 0 : i32
    %2 = arith.cmpi ne, %1, %c0_i32_0 : i32
    scf.if %2 {
      %c0_42 = arith.constant 0 : index
      %c0_43 = arith.constant 0 : index
      %104 = vector.load %arg1[%c0_42, %c0_43] : memref<32x256xf32, #tpu.memory_space<vmem>>, vector<32x256xf32>
      %c0_44 = arith.constant 0 : index
      %c0_45 = arith.constant 0 : index
      %105 = vector.load %arg8[%c0_44, %c0_45] : memref<32x256xf32, #tpu.memory_space<vmem>>, vector<32x256xf32>
      tpu.vector_store %arg8[%c0_44, %c0_45], %104 {strides = array<i32>} : memref<32x256xf32, #tpu.memory_space<vmem>>, vector<32x256xf32>,
    } else {
    }
    %c0 = arith.constant 0 : index
    %c0_1 = arith.constant 0 : index
    %3 = vector.load %arg8[%c0, %c0_1] : memref<32x256xf32, #tpu.memory_space<vmem>>, vector<32x256xf32>
    %4 = arith.truncf %3 : vector<32x256xf32> to vector<32x256xbf16>
    %c0_2 = arith.constant 0 : index
    %c0_3 = arith.constant 0 : index
    %c0_4 = arith.constant 0 : index
    %5 = vector.load %arg5[%c0_2, %c0_3, %c0_4] : memref<1x8x512xf32, #tpu.memory_space<vmem>>, vector<1x8x512xf32>
    %6 = vector.shape_cast %5 : vector<1x8x512xf32> to vector<8x512xf32>
    %7 = vector.extract_strided_slice %6 {offsets = [0, 0], sizes = [1, 256], strides = [1, 1]} : vector<8x512xf32> to vector<1x256xf32>
    %8 = vector.extract_strided_slice %6 {offsets = [1, 0], sizes = [1, 256], strides = [1, 1]} : vector<8x512xf32> to vector<1x256xf32>
    %9 = vector.extract_strided_slice %6 {offsets = [2, 0], sizes = [1, 256], strides = [1, 1]} : vector<8x512xf32> to vector<1x256xf32>
    %10 = vector.extract_strided_slice %6 {offsets = [3, 0], sizes = [1, 512], strides = [1, 1]} : vector<8x512xf32> to vector<1x512xf32>
    %11 = vector.extract_strided_slice %6 {offsets = [4, 0], sizes = [1, 256], strides = [1, 1]} : vector<8x512xf32> to vector<1x256xf32>
    %12 = vector.extract_strided_slice %6 {offsets = [5, 0], sizes = [1, 256], strides = [1, 1]} : vector<8x512xf32> to vector<1x256xf32>
    %13 = vector.extract_strided_slice %6 {offsets = [6, 0], sizes = [1, 256], strides = [1, 1]} : vector<8x512xf32> to vector<1x256xf32>
    %c0_5 = arith.constant 0 : index
    %c0_6 = arith.constant 0 : index
    %c0_7 = arith.constant 0 : index
    %14 = vector.load %arg4[%c0_5, %c0_6, %c0_7] : memref<1x256x768xbf16, #tpu.memory_space<vmem>>, vector<1x256x768xbf16>
    %15 = vector.shape_cast %14 : vector<1x256x768xbf16> to vector<256x768xbf16>
    %cst = arith.constant dense<0.000000e+00> : vector<32x768xf32>
    %16 = tpu.matmul %4, %15, %cst {dimension_numbers = #tpu.dot_dimension_numbers<[1], [0], [0], [1], [0, 0, 1, 1], [], []>} : vector<32x256xbf16>, vector<256x768xbf16>, vector<32x768xf32> -> vector<32x768xf32>
    %17 = vector.extract_strided_slice %16 {offsets = [0, 0], sizes = [32, 256], strides = [1, 1]} : vector<32x768xf32> to vector<32x256xf32>
    %18 = vector.extract_strided_slice %16 {offsets = [0, 256], sizes = [32, 256], strides = [1, 1]} : vector<32x768xf32> to vector<32x256xf32>
    %19 = vector.extract_strided_slice %16 {offsets = [0, 512], sizes = [32, 256], strides = [1, 1]} : vector<32x768xf32> to vector<32x256xf32>
    %20 = arith.truncf %17 : vector<32x256xf32> to vector<32x256xbf16>
    %21 = arith.truncf %18 : vector<32x256xf32> to vector<32x256xbf16>
    %cst_8 = arith.constant dense<0.000000e+00> : vector<32x32xf32>
    %22 = tpu.matmul %20, %21, %cst_8 {dimension_numbers = #tpu.dot_dimension_numbers<[1], [1], [0], [0], [0, 0, 1, 0], [], []>} : vector<32x256xbf16>, vector<32x256xbf16>, vector<32x32xf32> -> vector<32x32xf32>
    %cst_9 = arith.constant 0.176776692 : f32
    %23 = vector.broadcast %cst_9 : f32 to vector<32x32xf32>
    %24 = arith.mulf %22, %23 : vector<32x32xf32>
    %c0_10 = arith.constant 0 : index
    %c0_11 = arith.constant 0 : index
    %25 = vector.load %arg2[%c0_10, %c0_11] : memref<32x32xf32, #tpu.memory_space<vmem>>, vector<32x32xf32>
    %26 = arith.addf %24, %25 : vector<32x32xf32>
    %cst_12 = arith.constant dense<0xFF800000> : vector<32xf32>
    %27 = vector.multi_reduction <maximumf>, %26, %cst_12 [1] : vector<32x32xf32> to vector<32xf32>
    %28 = vector.shape_cast %27 : vector<32xf32> to vector<32x1xf32>
    %29 = vector.broadcast %28 : vector<32x1xf32> to vector<32x32xf32>
    %30 = arith.subf %26, %29 : vector<32x32xf32>
    %31 = math.exp %30 : vector<32x32xf32>
    %cst_13 = arith.constant dense<0.000000e+00> : vector<32xf32>
    %32 = vector.multi_reduction <add>, %31, %cst_13 [1] : vector<32x32xf32> to vector<32xf32>
    %33 = vector.shape_cast %32 : vector<32xf32> to vector<32x1xf32>
    %34 = tpu.reciprocal %33 {approx = true} : vector<32x1xf32> -> vector<32x1xf32>
    %35 = vector.broadcast %34 : vector<32x1xf32> to vector<32x32xf32>
    %36 = arith.mulf %31, %35 : vector<32x32xf32>
    %37 = arith.truncf %36 : vector<32x32xf32> to vector<32x32xbf16>
    %c0_14 = arith.constant 0 : index
    %c0_15 = arith.constant 0 : index
    %38 = vector.load %arg3[%c0_14, %c0_15] : memref<32x128xbf16, #tpu.memory_space<vmem>>, vector<32x128xbf16>
    %cst_16 = arith.constant dense<0.000000e+00> : vector<32x128xf32>
    %39 = tpu.matmul %37, %38, %cst_16 {dimension_numbers = #tpu.dot_dimension_numbers<[1], [0], [0], [1], [0, 0, 1, 1], [], []>} : vector<32x32xbf16>, vector<32x128xbf16>, vector<32x128xf32> -> vector<32x128xf32>
    %c0_17 = arith.constant 0 : index
    %c0_18 = arith.constant 0 : index
    %c0_19 = arith.constant 0 : index
    %40 = vector.load %arg9[%c0_17, %c0_18, %c0_19] : memref<1x32x128xf32, #tpu.memory_space<vmem>>, vector<1x32x128xf32>
    %41 = vector.shape_cast %40 : vector<1x32x128xf32> to vector<32x128xf32>
    %42 = vector.shape_cast %39 : vector<32x128xf32> to vector<1x32x128xf32>
    tpu.vector_store %arg9[%c0_17, %c0_18, %c0_19], %42 {strides = array<i32>} : memref<1x32x128xf32, #tpu.memory_space<vmem>>, vector<1x32x128xf32>,
    %43 = arith.truncf %19 : vector<32x256xf32> to vector<32x256xbf16>
    %cst_20 = arith.constant dense<0.000000e+00> : vector<32x256xf32>
    %44 = tpu.matmul %37, %43, %cst_20 {dimension_numbers = #tpu.dot_dimension_numbers<[1], [0], [0], [1], [0, 0, 1, 1], [], []>} : vector<32x32xbf16>, vector<32x256xbf16>, vector<32x256xf32> -> vector<32x256xf32>
    %45 = vector.broadcast %7 : vector<1x256xf32> to vector<32x256xf32>
    %46 = arith.addf %44, %45 : vector<32x256xf32>
    %47 = arith.addf %3, %46 : vector<32x256xf32>
    %cst_21 = arith.constant dense<0.000000e+00> : vector<32xf32>
    %48 = vector.multi_reduction <add>, %47, %cst_21 [1] : vector<32x256xf32> to vector<32xf32>
    %49 = vector.shape_cast %48 : vector<32xf32> to vector<32x1xf32>
    %cst_22 = arith.constant 2.560000e+02 : f32
    %50 = vector.broadcast %cst_22 : f32 to vector<32x1xf32>
    %51 = arith.divf %49, %50 : vector<32x1xf32>
    %52 = vector.broadcast %51 : vector<32x1xf32> to vector<32x256xf32>
    %53 = arith.subf %47, %52 : vector<32x256xf32>
    %54 = arith.mulf %53, %53 : vector<32x256xf32>
    %cst_23 = arith.constant dense<0.000000e+00> : vector<32xf32>
    %55 = vector.multi_reduction <add>, %54, %cst_23 [1] : vector<32x256xf32> to vector<32xf32>
    %56 = vector.shape_cast %55 : vector<32xf32> to vector<32x1xf32>
    %cst_24 = arith.constant 2.560000e+02 : f32
    %57 = vector.broadcast %cst_24 : f32 to vector<32x1xf32>
    %58 = arith.divf %56, %57 : vector<32x1xf32>
    %cst_25 = arith.constant 9.99999974E-6 : f32
    %59 = vector.broadcast %cst_25 : f32 to vector<32x1xf32>
    %60 = arith.addf %58, %59 : vector<32x1xf32>
    %61 = math.rsqrt %60 : vector<32x1xf32>
    %62 = vector.broadcast %61 : vector<32x1xf32> to vector<32x256xf32>
    %63 = arith.mulf %53, %62 : vector<32x256xf32>
    %64 = vector.broadcast %8 : vector<1x256xf32> to vector<32x256xf32>
    %65 = arith.mulf %63, %64 : vector<32x256xf32>
    %66 = vector.broadcast %9 : vector<1x256xf32> to vector<32x256xf32>
    %67 = arith.addf %65, %66 : vector<32x256xf32>
    %68 = arith.truncf %67 : vector<32x256xf32> to vector<32x256xbf16>
    %c0_26 = arith.constant 0 : index
    %c0_27 = arith.constant 0 : index
    %c0_28 = arith.constant 0 : index
    %69 = vector.load %arg6[%c0_26, %c0_27, %c0_28] : memref<1x256x512xbf16, #tpu.memory_space<vmem>>, vector<1x256x512xbf16>
    %70 = vector.shape_cast %69 : vector<1x256x512xbf16> to vector<256x512xbf16>
    %cst_29 = arith.constant dense<0.000000e+00> : vector<32x512xf32>
    %71 = tpu.matmul %68, %70, %cst_29 {dimension_numbers = #tpu.dot_dimension_numbers<[1], [0], [0], [1], [0, 0, 1, 1], [], []>} : vector<32x256xbf16>, vector<256x512xbf16>, vector<32x512xf32> -> vector<32x512xf32>
    %72 = vector.broadcast %10 : vector<1x512xf32> to vector<32x512xf32>
    %73 = arith.addf %71, %72 : vector<32x512xf32>
    %cst_30 = arith.constant 0.000000e+00 : f32
    %74 = vector.broadcast %cst_30 : f32 to vector<32x512xf32>
    %75 = arith.maximumf %73, %74 : vector<32x512xf32>
    %76 = arith.truncf %75 : vector<32x512xf32> to vector<32x512xbf16>
    %c0_31 = arith.constant 0 : index
    %c0_32 = arith.constant 0 : index
    %c0_33 = arith.constant 0 : index
    %77 = vector.load %arg7[%c0_31, %c0_32, %c0_33] : memref<1x512x256xbf16, #tpu.memory_space<vmem>>, vector<1x512x256xbf16>
    %78 = vector.shape_cast %77 : vector<1x512x256xbf16> to vector<512x256xbf16>
    %cst_34 = arith.constant dense<0.000000e+00> : vector<32x256xf32>
    %79 = tpu.matmul %76, %78, %cst_34 {dimension_numbers = #tpu.dot_dimension_numbers<[1], [0], [0], [1], [0, 0, 1, 1], [], []>} : vector<32x512xbf16>, vector<512x256xbf16>, vector<32x256xf32> -> vector<32x256xf32>
    %80 = vector.broadcast %11 : vector<1x256xf32> to vector<32x256xf32>
    %81 = arith.addf %79, %80 : vector<32x256xf32>
    %82 = arith.addf %67, %81 : vector<32x256xf32>
    %cst_35 = arith.constant dense<0.000000e+00> : vector<32xf32>
    %83 = vector.multi_reduction <add>, %82, %cst_35 [1] : vector<32x256xf32> to vector<32xf32>
    %84 = vector.shape_cast %83 : vector<32xf32> to vector<32x1xf32>
    %cst_36 = arith.constant 2.560000e+02 : f32
    %85 = vector.broadcast %cst_36 : f32 to vector<32x1xf32>
    %86 = arith.divf %84, %85 : vector<32x1xf32>
    %87 = vector.broadcast %86 : vector<32x1xf32> to vector<32x256xf32>
    %88 = arith.subf %82, %87 : vector<32x256xf32>
    %89 = arith.mulf %88, %88 : vector<32x256xf32>
    %cst_37 = arith.constant dense<0.000000e+00> : vector<32xf32>
    %90 = vector.multi_reduction <add>, %89, %cst_37 [1] : vector<32x256xf32> to vector<32xf32>
    %91 = vector.shape_cast %90 : vector<32xf32> to vector<32x1xf32>
    %cst_38 = arith.constant 2.560000e+02 : f32
    %92 = vector.broadcast %cst_38 : f32 to vector<32x1xf32>
    %93 = arith.divf %91, %92 : vector<32x1xf32>
    %cst_39 = arith.constant 9.99999974E-6 : f32
    %94 = vector.broadcast %cst_39 : f32 to vector<32x1xf32>
    %95 = arith.addf %93, %94 : vector<32x1xf32>
    %96 = math.rsqrt %95 : vector<32x1xf32>
    %97 = vector.broadcast %96 : vector<32x1xf32> to vector<32x256xf32>
    %98 = arith.mulf %88, %97 : vector<32x256xf32>
    %99 = vector.broadcast %12 : vector<1x256xf32> to vector<32x256xf32>
    %100 = arith.mulf %98, %99 : vector<32x256xf32>
    %101 = vector.broadcast %13 : vector<1x256xf32> to vector<32x256xf32>
    %102 = arith.addf %100, %101 : vector<32x256xf32>
    %c0_40 = arith.constant 0 : index
    %c0_41 = arith.constant 0 : index
    %103 = vector.load %arg8[%c0_40, %c0_41] : memref<32x256xf32, #tpu.memory_space<vmem>>, vector<32x256xf32>
    tpu.vector_store %arg8[%c0_40, %c0_41], %102 {strides = array<i32>} : memref<32x256xf32, #tpu.memory_space<vmem>>, vector<32x256xf32>,
    return
  }
  func.func @transform_0(%arg0: i32) -> (i32, i32) {
    %c0_i32 = arith.constant 0 : i32
    %c0_i32_0 = arith.constant 0 : i32
    %c0_i32_1 = arith.constant 0 : i32
    return %c0_i32, %c0_i32_0 : i32, i32
  }
  func.func @transform_1(%arg0: i32) -> (i32, i32) {
    %c0_i32 = arith.constant 0 : i32
    %c0_i32_0 = arith.constant 0 : i32
    %c0_i32_1 = arith.constant 0 : i32
    return %c0_i32, %c0_i32_0 : i32, i32
  }
  func.func @transform_2(%arg0: i32) -> (i32, i32) {
    %c0_i32 = arith.constant 0 : i32
    %c0_i32_0 = arith.constant 0 : i32
    %c0_i32_1 = arith.constant 0 : i32
    return %c0_i32, %c0_i32_0 : i32, i32
  }
  func.func @transform_3(%arg0: i32) -> (i32, i32, i32) {
    %c0_i32 = arith.constant 0 : i32
    %c0_i32_0 = arith.constant 0 : i32
    %c0_i32_1 = arith.constant 0 : i32
    return %arg0, %c0_i32, %c0_i32_0 : i32, i32, i32
  }
  func.func @transform_4(%arg0: i32) -> (i32, i32, i32) {
    %c0_i32 = arith.constant 0 : i32
    %c0_i32_0 = arith.constant 0 : i32
    %c0_i32_1 = arith.constant 0 : i32
    return %arg0, %c0_i32, %c0_i32_0 : i32, i32, i32
  }
  func.func @transform_5(%arg0: i32) -> (i32, i32, i32) {
    %c0_i32 = arith.constant 0 : i32
    %c0_i32_0 = arith.constant 0 : i32
    %c0_i32_1 = arith.constant 0 : i32
    return %arg0, %c0_i32, %c0_i32_0 : i32, i32, i32
  }
  func.func @transform_6(%arg0: i32) -> (i32, i32, i32) {
    %c0_i32 = arith.constant 0 : i32
    %c0_i32_0 = arith.constant 0 : i32
    %c0_i32_1 = arith.constant 0 : i32
    return %arg0, %c0_i32, %c0_i32_0 : i32, i32, i32
  }
  func.func @transform_7(%arg0: i32) -> (i32, i32) {
    %c0_i32 = arith.constant 0 : i32
    %c0_i32_0 = arith.constant 0 : i32
    %c0_i32_1 = arith.constant 0 : i32
    return %c0_i32, %c0_i32_0 : i32, i32
  }
  func.func @transform_8(%arg0: i32) -> (i32, i32, i32) {
    %c0_i32 = arith.constant 0 : i32
    %c0_i32_0 = arith.constant 0 : i32
    %c0_i32_1 = arith.constant 0 : i32
    return %arg0, %c0_i32, %c0_i32_0 : i32, i32, i32
  }
}

</mosaic_0001>

<llo_original>
// kernel: tpu_custom_call.1
$region0: #{tpu_custom_call.1}
  #allocation0 [shape = 'u32[]', space=smem, size = 0x4, offset = 0x4, fixed_abs, tag = 'smem constant byte address 0x4 - core index']
  #allocation1 [shape = 'u32[144,128]{1,0:T(1,128)}', space=vmem, size = 0x12000, scoped, tag = 'internal scratch']
  %s0 = inlined_call_operand.hbm [shape: f32[32,256], index: 0, kind: input, shape index: {}]
  %s1 = inlined_call_operand.hbm [shape: f32[32,32], index: 1, kind: input, shape index: {}]
  %s2 = inlined_call_operand.hbm [shape: bf16[32,128], index: 2, kind: input, shape index: {}]
  %s3 = inlined_call_operand.hbm [shape: bf16[2,256,768], index: 3, kind: input, shape index: {}]
  %s4 = inlined_call_operand.hbm [shape: f32[2,8,512], index: 4, kind: input, shape index: {}]
  %s5 = inlined_call_operand.hbm [shape: bf16[2,256,512], index: 5, kind: input, shape index: {}]
  %s6 = inlined_call_operand.hbm [shape: bf16[2,512,256], index: 6, kind: input, shape index: {}]
  %s7 = inlined_call_operand.hbm [shape: f32[32,256], index: 7, kind: output, shape index: {0}]
  %s8 = inlined_call_operand.hbm [shape: f32[2,32,128], index: 8, kind: output, shape index: {1}]
  %9 = xla_tuple %s7, %s8
  %s10 = sld [smem:[#allocation0]]
  $region101: #{tpu_custom_call.1} parent=0
    _
  %s12 = ssub.s32 1, %s10
  %s13 = scalar_select 0, %s12, %s10
  $region1: #{tpu_custom_call.1} parent=0
    #allocation2 [shape = 'u8[32768]{0}', space=vmem, size = 0x8000, scoped, tag = 'input window, operand 0, single buffered']
    #allocation3 [shape = 's32[2]{0}', space=sflag, size = 0x8, scoped, tag = 'scoped memory for tpu_custom_call.1']
    #allocation4 [shape = 's32[2]{0}', space=sflag, size = 0x8, scoped, tag = 'scoped memory for tpu_custom_call.1']
    #allocation5 [shape = 'u8[16384]{0}', space=vmem, size = 0x4000, scoped, tag = 'input window, operand 1, single buffered']
    #allocation6 [shape = 's32[1]{0}', space=sflag, size = 0x4, scoped, tag = 'scoped memory for tpu_custom_call.1']
    #allocation7 [shape = 'u8[8192]{0}', space=vmem, size = 0x2000, scoped, tag = 'input window, operand 2, single buffered']
    #allocation8 [shape = 'u8[786432]{0}', space=vmem, size = 0xc0000, scoped, tag = 'input window, operand 3']
    #allocation9 [shape = 's32[2]{0}', space=sflag, size = 0x8, scoped, tag = 'scoped memory for tpu_custom_call.1']
    #allocation10 [shape = 'u8[32768]{0}', space=vmem, size = 0x8000, scoped, tag = 'input window, operand 4']
    #allocation11 [shape = 'u8[524288]{0}', space=vmem, size = 0x80000, scoped, tag = 'input window, operand 5']
    #allocation12 [shape = 's32[2]{0}', space=sflag, size = 0x8, scoped, tag = 'scoped memory for tpu_custom_call.1']
    #allocation13 [shape = 'u8[524288]{0}', space=vmem, size = 0x80000, scoped, tag = 'input window, operand 6']
    #allocation14 [shape = 'u8[32768]{0}', space=vmem, size = 0x8000, scoped, tag = 'output window, operand 0, single buffered']
    #allocation15 [shape = 'u8[32768]{0}', space=vmem, size = 0x8000, scoped, tag = 'output window, operand 1']
    #allocation16 [shape = 's32[2]{0}', space=sflag, size = 0x8, scoped, tag = 'scoped memory for tpu_custom_call.1']
    %14 = vsyncpa [#allocation3], 0
    %15 = vsyncpa [#allocation6], 0
    %16 = vsyncpa [#allocation9], 0
    %s17 = scalar_lea.sflag [#allocation9], 1
    %18 = vsyncpa %s17, 0
    %19 = vsyncpa [#allocation12], 0
    %s20 = scalar_lea.sflag [#allocation12], 1
    %21 = vsyncpa %s20, 0
    %22 = vsyncpa [#allocation4], 0
    %23 = vsyncpa [#allocation16], 0
    %s24 = scalar_lea.sflag [#allocation16], 1
    %25 = vsyncpa %s24, 0
    loop: start=0, step=1, limit=4
    $region2: #{tpu_custom_call.1} parent=1 // loop_pre_header
      _
    $region3: #{tpu_custom_call.1} parent=1 // loop_header
      %s27 = sphi 0, %s31
      %p28 = scmp.ge.s32.totalorder %s27, 4
      %s35 = sphi 0, %s35
      %s37 = sphi 0, %s35
      %s38 = sphi 0, %s37
      %s52 = sphi 0, %s38
      %s56 = sphi 0, %s56
      %s58 = sphi 0, %s56
      %s59 = sphi 0, %s58
      %s73 = sphi 0, %s59
      %s77 = sphi 0, %s77
      %s79 = sphi 0, %s77
      %s80 = sphi 0, %s79
      %s94 = sphi 0, %s80
      %s100 = sphi 0, %s102
      %s103 = sphi 0, %s100
      %s104 = sphi 0, %s103
      %s120 = sphi 0, %s104
      %s126 = sphi 0, %s128
      %s129 = sphi 0, %s126
      %s130 = sphi 0, %s129
      %s146 = sphi 0, %s130
      %s152 = sphi 0, %s154
      %s155 = sphi 0, %s152
      %s156 = sphi 0, %s155
      %s172 = sphi 0, %s156
      %s178 = sphi 0, %s180
      %s181 = sphi 0, %s178
      %s182 = sphi 0, %s181
      %s198 = sphi 0, %s182
      %s202 = sphi 0, %s202
      %s204 = sphi 0, %s202
      %s205 = sphi 0, %s204
      %s219 = sphi 0, %s205
      %s225 = sphi 0, %s227
      %s228 = sphi 0, %s225
      %s229 = sphi 0, %s228
      %s245 = sphi 0, %s229
    $region4: #{tpu_custom_call.1} parent=1 // loop_header_branch
      %30 = sbr.rel (%p28) target = $region8
    $region5: #{tpu_custom_call.1} parent=1 // loop_body
      %s32 = ssub.s32 %s27, 1
      %s33 = ssub.s32 %s27, 2
      %s34 = sadd.s32 %s27, 1
      %s36 = sadd.s32 %s35, 1
      %p39 = scmp.eq.s32.totalorder %s27, 1
      %p40 = scmp.ne.s32.totalorder %s35, %s37
      %p41 = scmp.eq.s32.totalorder %s27, 0
      %p42 = por %p40, %p41
      %p43 = scmp.ne.s32.totalorder %s35, %s37
      %p44 = scmp.eq.s32.totalorder %s32, 1
      %p45 = por %p43, %p44
      %p46 = scmp.ne.s32.totalorder %s37, %s38
      %p47 = scmp.eq.s32.totalorder %s32, 0
      %p48 = por %p46, %p47
      %p49 = scmp.ne.s32.totalorder %s37, %s38
      %p50 = scmp.eq.s32.totalorder %s33, 1
      %p51 = por %p49, %p50
      %p53 = scmp.ne.s32.totalorder %s38, %s52
      %p54 = scmp.eq.s32.totalorder %s33, 0
      %p55 = por %p53, %p54
      %s57 = sadd.s32 %s56, 1
      %p60 = scmp.eq.s32.totalorder %s27, 1
      %p61 = scmp.ne.s32.totalorder %s56, %s58
      %p62 = scmp.eq.s32.totalorder %s27, 0
      %p63 = por %p61, %p62
      %p64 = scmp.ne.s32.totalorder %s56, %s58
      %p65 = scmp.eq.s32.totalorder %s32, 1
      %p66 = por %p64, %p65
      %p67 = scmp.ne.s32.totalorder %s58, %s59
      %p68 = scmp.eq.s32.totalorder %s32, 0
      %p69 = por %p67, %p68
      %p70 = scmp.ne.s32.totalorder %s58, %s59
      %p71 = scmp.eq.s32.totalorder %s33, 1
      %p72 = por %p70, %p71
      %p74 = scmp.ne.s32.totalorder %s59, %s73
      %p75 = scmp.eq.s32.totalorder %s33, 0
      %p76 = por %p74, %p75
      %s78 = sadd.s32 %s77, 1
      %p81 = scmp.eq.s32.totalorder %s27, 1
      %p82 = scmp.ne.s32.totalorder %s77, %s79
      %p83 = scmp.eq.s32.totalorder %s27, 0
      %p84 = por %p82, %p83
      %p85 = scmp.ne.s32.totalorder %s77, %s79
      %p86 = scmp.eq.s32.totalorder %s32, 1
      %p87 = por %p85, %p86
      %p88 = scmp.ne.s32.totalorder %s79, %s80
      %p89 = scmp.eq.s32.totalorder %s32, 0
      %p90 = por %p88, %p89
      %p91 = scmp.ne.s32.totalorder %s79, %s80
      %p92 = scmp.eq.s32.totalorder %s33, 1
      %p93 = por %p91, %p92
      %p95 = scmp.ne.s32.totalorder %s80, %s94
      %p96 = scmp.eq.s32.totalorder %s33, 0
      %p97 = por %p95, %p96
      %s98 = ssub.s32 %s27, %s34
      %p99 = scmp.eq.s32.totalorder %s98, 0
      %s101 = sadd.s32 %s100, 1
      %s102 = scalar_select %p99, %s100, %s101
      %p105 = pneg %p99
      %p106 = scmp.eq.s32.totalorder %s27, 1
      %p107 = por %p105, %p106
      %p108 = scmp.ne.s32.totalorder %s100, %s103
      %p109 = scmp.eq.s32.totalorder %s27, 0
      %p110 = por %p108, %p109
      %p111 = scmp.ne.s32.totalorder %s100, %s103
      %p112 = scmp.eq.s32.totalorder %s32, 1
      %p113 = por %p111, %p112
      %p114 = scmp.ne.s32.totalorder %s103, %s104
      %p115 = scmp.eq.s32.totalorder %s32, 0
      %p116 = por %p114, %p115
      %p117 = scmp.ne.s32.totalorder %s103, %s104
      %p118 = scmp.eq.s32.totalorder %s33, 1
      %p119 = por %p117, %p118
      %p121 = scmp.ne.s32.totalorder %s104, %s120
      %p122 = scmp.eq.s32.totalorder %s33, 0
      %p123 = por %p121, %p122
      %s124 = ssub.s32 %s27, %s34
      %p125 = scmp.eq.s32.totalorder %s124, 0
      %s127 = sadd.s32 %s126, 1
      %s128 = scalar_select %p125, %s126, %s127
      %p131 = pneg %p125
      %p132 = scmp.eq.s32.totalorder %s27, 1
      %p133 = por %p131, %p132
      %p134 = scmp.ne.s32.totalorder %s126, %s129
      %p135 = scmp.eq.s32.totalorder %s27, 0
      %p136 = por %p134, %p135
      %p137 = scmp.ne.s32.totalorder %s126, %s129
      %p138 = scmp.eq.s32.totalorder %s32, 1
      %p139 = por %p137, %p138
      %p140 = scmp.ne.s32.totalorder %s129, %s130
      %p141 = scmp.eq.s32.totalorder %s32, 0
      %p142 = por %p140, %p141
      %p143 = scmp.ne.s32.totalorder %s129, %s130
      %p144 = scmp.eq.s32.totalorder %s33, 1
      %p145 = por %p143, %p144
      %p147 = scmp.ne.s32.totalorder %s130, %s146
      %p148 = scmp.eq.s32.totalorder %s33, 0
      %p149 = por %p147, %p148
      %s150 = ssub.s32 %s27, %s34
      %p151 = scmp.eq.s32.totalorder %s150, 0
      %s153 = sadd.s32 %s152, 1
      %s154 = scalar_select %p151, %s152, %s153
      %p157 = pneg %p151
      %p158 = scmp.eq.s32.totalorder %s27, 1
      %p159 = por %p157, %p158
      %p160 = scmp.ne.s32.totalorder %s152, %s155
      %p161 = scmp.eq.s32.totalorder %s27, 0
      %p162 = por %p160, %p161
      %p163 = scmp.ne.s32.totalorder %s152, %s155
      %p164 = scmp.eq.s32.totalorder %s32, 1
      %p165 = por %p163, %p164
      %p166 = scmp.ne.s32.totalorder %s155, %s156
      %p167 = scmp.eq.s32.totalorder %s32, 0
      %p168 = por %p166, %p167
      %p169 = scmp.ne.s32.totalorder %s155, %s156
      %p170 = scmp.eq.s32.totalorder %s33, 1
      %p171 = por %p169, %p170
      %p173 = scmp.ne.s32.totalorder %s156, %s172
      %p174 = scmp.eq.s32.totalorder %s33, 0
      %p175 = por %p173, %p174
      %s176 = ssub.s32 %s27, %s34
      %p177 = scmp.eq.s32.totalorder %s176, 0
      %s179 = sadd.s32 %s178, 1
      %s180 = scalar_select %p177, %s178, %s179
      %p183 = pneg %p177
      %p184 = scmp.eq.s32.totalorder %s27, 1
      %p185 = por %p183, %p184
      %p186 = scmp.ne.s32.totalorder %s178, %s181
      %p187 = scmp.eq.s32.totalorder %s27, 0
      %p188 = por %p186, %p187
      %p189 = scmp.ne.s32.totalorder %s178, %s181
      %p190 = scmp.eq.s32.totalorder %s32, 1
      %p191 = por %p189, %p190
      %p192 = scmp.ne.s32.totalorder %s181, %s182
      %p193 = scmp.eq.s32.totalorder %s32, 0
      %p194 = por %p192, %p193
      %p195 = scmp.ne.s32.totalorder %s181, %s182
      %p196 = scmp.eq.s32.totalorder %s33, 1
      %p197 = por %p195, %p196
      %p199 = scmp.ne.s32.totalorder %s182, %s198
      %p200 = scmp.eq.s32.totalorder %s33, 0
      %p201 = por %p199, %p200
      %s203 = sadd.s32 %s202, 1
      %p206 = scmp.eq.s32.totalorder %s27, 1
      %p207 = scmp.ne.s32.totalorder %s202, %s204
      %p208 = scmp.eq.s32.totalorder %s27, 0
      %p209 = por %p207, %p208
      %p210 = scmp.ne.s32.totalorder %s202, %s204
      %p211 = scmp.eq.s32.totalorder %s32, 1
      %p212 = por %p210, %p211
      %p213 = scmp.ne.s32.totalorder %s204, %s205
      %p214 = scmp.eq.s32.totalorder %s32, 0
      %p215 = por %p213, %p214
      %p216 = scmp.ne.s32.totalorder %s204, %s205
      %p217 = scmp.eq.s32.totalorder %s33, 1
      %p218 = por %p216, %p217
      %p220 = scmp.ne.s32.totalorder %s205, %s219
      %p221 = scmp.eq.s32.totalorder %s33, 0
      %p222 = por %p220, %p221
      %s223 = ssub.s32 %s27, %s34
      %p224 = scmp.eq.s32.totalorder %s223, 0
      %s226 = sadd.s32 %s225, 1
      %s227 = scalar_select %p224, %s225, %s226
      %p230 = pneg %p224
      %p231 = scmp.eq.s32.totalorder %s27, 1
      %p232 = por %p230, %p231
      %p233 = scmp.ne.s32.totalorder %s225, %s228
      %p234 = scmp.eq.s32.totalorder %s27, 0
      %p235 = por %p233, %p234
      %p236 = scmp.ne.s32.totalorder %s225, %s228
      %p237 = scmp.eq.s32.totalorder %s32, 1
      %p238 = por %p236, %p237
      %p239 = scmp.ne.s32.totalorder %s228, %s229
      %p240 = scmp.eq.s32.totalorder %s32, 0
      %p241 = por %p239, %p240
      %p242 = scmp.ne.s32.totalorder %s228, %s229
      %p243 = scmp.eq.s32.totalorder %s33, 1
      %p244 = por %p242, %p243
      %p246 = scmp.ne.s32.totalorder %s229, %s245
      %p247 = scmp.eq.s32.totalorder %s33, 0
      %p248 = por %p246, %p247
      %p249 = scmp.le.s32.totalorder 1, %s27
      %p250 = scmp.lt.s32.totalorder %s27, 3
      %p251 = pnand %p249, %p250
      %p252 = pneg %p251
      // Predicated region
      $region9: #{tpu_custom_call.1} parent=5 // pred_check
        _
      $region10: #{tpu_custom_call.1} parent=5 // pred_check_branch
        %254 = sbr.rel (%p251) target = $region12
      $region11: #{tpu_custom_call.1} parent=5 // pred_region
        %s255 = ssub.s32 %s27, 1
        // Predicated region
        $region13: #{tpu_custom_call.1} parent=11 // pred_check
          %p256 = pneg %p48
        $region14: #{tpu_custom_call.1} parent=11 // pred_check_branch
          %258 = sbr.rel (%p256) target = $region16
        $region15: #{tpu_custom_call.1} parent=11 // pred_region
          %s260 = ssub.s32 1024, 1024
          %261 = vsyncadd [#allocation3], %s260
          %s262 = sshll.u32 [#allocation2], 4
          %s263 = int_to_ptr.vmem [resolvable:$true] %s262
          %268 = dma.hbm_to_vmem [thread:$0]  %s0, 1024, %s263, [#allocation3], 256, 256, 16
        $region16: #{tpu_custom_call.1} parent=11 // pred_fallthru
          _
        // Predicated region
        $region17: #{tpu_custom_call.1} parent=11 // pred_check
          %p269 = pneg %p69
        $region18: #{tpu_custom_call.1} parent=11 // pred_check_branch
          %271 = sbr.rel (%p269) target = $region20
        $region19: #{tpu_custom_call.1} parent=11 // pred_region
          %s273 = ssub.s32 512, 512
          %274 = vsyncadd [#allocation6], %s273
          %s275 = sshll.u32 [#allocation5], 4
          %s276 = int_to_ptr.vmem [resolvable:$true] %s275
          %281 = dma.hbm_to_vmem [thread:$0]  %s1, 512, %s276, [#allocation6], 128, 128, 8
        $region20: #{tpu_custom_call.1} parent=11 // pred_fallthru
          _
        // Predicated region
        $region21: #{tpu_custom_call.1} parent=11 // pred_check
          %p282 = pneg %p90
        $region22: #{tpu_custom_call.1} parent=11 // pred_check_branch
          %284 = sbr.rel (%p282) target = $region24
        $region23: #{tpu_custom_call.1} parent=11 // pred_region
          %s286 = ssub.s32 256, 256
          %287 = vsyncadd [#allocation6], %s286
          %s288 = sshll.u32 [#allocation7], 4
          %s289 = int_to_ptr.vmem [resolvable:$true] %s288
          %294 = dma.hbm_to_vmem [thread:$0]  %s2, 256, %s289, [#allocation6], 64, 64, 4
        $region24: #{tpu_custom_call.1} parent=11 // pred_fallthru
          _
      $region12: #{tpu_custom_call.1} parent=5 // pred_fallthru
        _
      %p295 = scmp.lt.s32.totalorder %s27, 2
      // Predicated region
      $region25: #{tpu_custom_call.1} parent=5 // pred_check
        %p296 = pneg %p295
      $region26: #{tpu_custom_call.1} parent=5 // pred_check_branch
        %298 = sbr.rel (%p296) target = $region28
      $region27: #{tpu_custom_call.1} parent=5 // pred_region
        // Predicated region
        $region29: #{tpu_custom_call.1} parent=27 // pred_check
          %p299 = pneg %p110
        $region30: #{tpu_custom_call.1} parent=27 // pred_check_branch
          %301 = sbr.rel (%p299) target = $region32
        $region31: #{tpu_custom_call.1} parent=27 // pred_region
          %s302 = sand.u32 %s27, 1
          %s303 = scalar_lea.sflag [#allocation9], %s302
          %s304 = sand.u32 %s100, 1
          %s305 = smul.addr %s304, 768
          %s306 = scalar_lea.vmem [#allocation8], %s305
          %s308 = ssub.s32 12288, 12288
          %309 = vsyncadd %s303, %s308
          %s310 = smul.addr %s27, 192
          %s311 = smul.addr %s310, 64
          %s312 = scalar_lea.hbm %s3, %s311
          %s313 = sshll.u32 %s306, 4
          %s314 = int_to_ptr.vmem [resolvable:$true] %s313
          %319 = dma.hbm_to_vmem [thread:$0]  %s312, 12288, %s314, %s303, 384, 384, 24
        $region32: #{tpu_custom_call.1} parent=27 // pred_fallthru
          _
        // Predicated region
        $region33: #{tpu_custom_call.1} parent=27 // pred_check
          %p320 = pneg %p136
        $region34: #{tpu_custom_call.1} parent=27 // pred_check_branch
          %322 = sbr.rel (%p320) target = $region36
        $region35: #{tpu_custom_call.1} parent=27 // pred_region
          %s323 = sand.u32 %s27, 1
          %s324 = scalar_lea.sflag [#allocation9], %s323
          %s325 = sand.u32 %s126, 1
          %s326 = smul.addr %s325, 32
          %s327 = scalar_lea.vmem [#allocation10], %s326
          %s329 = ssub.s32 512, 512
          %330 = vsyncadd %s324, %s329
          %s331 = smul.addr %s27, 4
          %s332 = smul.addr %s331, 128
          %s333 = scalar_lea.hbm %s4, %s332
          %s335 = sshll.u32 %s327, 4
          %s336 = int_to_ptr.vmem [resolvable:$true] %s335
          %338 = dma.hbm_to_vmem [thread:$0]  %s333, 512, %s336, %s324
        $region36: #{tpu_custom_call.1} parent=27 // pred_fallthru
          _
        // Predicated region
        $region37: #{tpu_custom_call.1} parent=27 // pred_check
          %p339 = pneg %p162
        $region38: #{tpu_custom_call.1} parent=27 // pred_check_branch
          %341 = sbr.rel (%p339) target = $region40
        $region39: #{tpu_custom_call.1} parent=27 // pred_region
          %s342 = sand.u32 %s27, 1
          %s343 = scalar_lea.sflag [#allocation12], %s342
          %s344 = sand.u32 %s152, 1
          %s345 = smul.addr %s344, 512
          %s346 = scalar_lea.vmem [#allocation11], %s345
          %s348 = ssub.s32 8192, 8192
          %349 = vsyncadd %s343, %s348
          %s350 = smul.addr %s27, 128
          %s351 = smul.addr %s350, 64
          %s352 = scalar_lea.hbm %s5, %s351
          %s353 = sshll.u32 %s346, 4
          %s354 = int_to_ptr.vmem [resolvable:$true] %s353
          %359 = dma.hbm_to_vmem [thread:$0]  %s352, 8192, %s354, %s343, 256, 256, 16
        $region40: #{tpu_custom_call.1} parent=27 // pred_fallthru
          _
        // Predicated region
        $region41: #{tpu_custom_call.1} parent=27 // pred_check
          %p360 = pneg %p188
        $region42: #{tpu_custom_call.1} parent=27 // pred_check_branch
          %362 = sbr.rel (%p360) target = $region44
        $region43: #{tpu_custom_call.1} parent=27 // pred_region
          %s363 = sand.u32 %s27, 1
          %s364 = scalar_lea.sflag [#allocation12], %s363
          %s365 = sand.u32 %s178, 1
          %s366 = smul.addr %s365, 512
          %s367 = scalar_lea.vmem [#allocation13], %s366
          %s369 = ssub.s32 8192, 8192
          %370 = vsyncadd %s364, %s369
          %s371 = smul.addr %s27, 128
          %s372 = smul.addr %s371, 64
          %s373 = scalar_lea.hbm %s6, %s372
          %s374 = sshll.u32 %s367, 4
          %s375 = int_to_ptr.vmem [resolvable:$true] %s374
          %380 = dma.hbm_to_vmem [thread:$0]  %s373, 8192, %s375, %s364, 128, 128, 8
        $region44: #{tpu_custom_call.1} parent=27 // pred_fallthru
          _
      $region28: #{tpu_custom_call.1} parent=5 // pred_fallthru
        _
      %p381 = scmp.le.s32.totalorder 1, %s27
      %p382 = scmp.lt.s32.totalorder %s27, 3
      %p383 = pnand %p381, %p382
      %p384 = pneg %p383
      // Predicated region
      $region45: #{tpu_custom_call.1} parent=5 // pred_check
        _
      $region46: #{tpu_custom_call.1} parent=5 // pred_check_branch
        %386 = sbr.rel (%p383) target = $region48
      $region47: #{tpu_custom_call.1} parent=5 // pred_region
        %s387 = ssub.s32 %s27, 1
        // Predicated region
        $region49: #{tpu_custom_call.1} parent=47 // pred_check
          %p388 = pneg %p48
        $region50: #{tpu_custom_call.1} parent=47 // pred_check_branch
          %390 = sbr.rel (%p388) target = $region52
        $region51: #{tpu_custom_call.1} parent=47 // pred_region
          %391 = dma.done [#allocation3], 1024
        $region52: #{tpu_custom_call.1} parent=47 // pred_fallthru
          _
        // Predicated region
        $region53: #{tpu_custom_call.1} parent=47 // pred_check
          %p392 = pneg %p69
        $region54: #{tpu_custom_call.1} parent=47 // pred_check_branch
          %394 = sbr.rel (%p392) target = $region56
        $region55: #{tpu_custom_call.1} parent=47 // pred_region
          %395 = dma.done [#allocation6], 512
        $region56: #{tpu_custom_call.1} parent=47 // pred_fallthru
          _
        // Predicated region
        $region57: #{tpu_custom_call.1} parent=47 // pred_check
          %p396 = pneg %p90
        $region58: #{tpu_custom_call.1} parent=47 // pred_check_branch
          %398 = sbr.rel (%p396) target = $region60
        $region59: #{tpu_custom_call.1} parent=47 // pred_region
          %399 = dma.done [#allocation6], 256
        $region60: #{tpu_custom_call.1} parent=47 // pred_fallthru
          _
        %s400 = sand.u32 %s32, 1
        %s401 = scalar_lea.sflag [#allocation9], %s400
        %s402 = sand.u32 %s103, 1
        %s403 = smul.addr %s402, 768
        %s404 = scalar_lea.vmem [#allocation8], %s403
        // Predicated region
        $region61: #{tpu_custom_call.1} parent=47 // pred_check
          %p405 = pneg %p116
        $region62: #{tpu_custom_call.1} parent=47 // pred_check_branch
          %407 = sbr.rel (%p405) target = $region64
        $region63: #{tpu_custom_call.1} parent=47 // pred_region
          %408 = dma.done %s401, 12288
        $region64: #{tpu_custom_call.1} parent=47 // pred_fallthru
          _
        %s409 = sand.u32 %s32, 1
        %s410 = scalar_lea.sflag [#allocation9], %s409
        %s411 = sand.u32 %s129, 1
        %s412 = smul.addr %s411, 32
        %s413 = scalar_lea.vmem [#allocation10], %s412
        // Predicated region
        $region65: #{tpu_custom_call.1} parent=47 // pred_check
          %p414 = pneg %p142
        $region66: #{tpu_custom_call.1} parent=47 // pred_check_branch
          %416 = sbr.rel (%p414) target = $region68
        $region67: #{tpu_custom_call.1} parent=47 // pred_region
          %417 = dma.done %s410, 512
        $region68: #{tpu_custom_call.1} parent=47 // pred_fallthru
          _
        %s418 = sand.u32 %s32, 1
        %s419 = scalar_lea.sflag [#allocation12], %s418
        %s420 = sand.u32 %s155, 1
        %s421 = smul.addr %s420, 512
        %s422 = scalar_lea.vmem [#allocation11], %s421
        // Predicated region
        $region69: #{tpu_custom_call.1} parent=47 // pred_check
          %p423 = pneg %p168
        $region70: #{tpu_custom_call.1} parent=47 // pred_check_branch
          %425 = sbr.rel (%p423) target = $region72
        $region71: #{tpu_custom_call.1} parent=47 // pred_region
          %426 = dma.done %s419, 8192
        $region72: #{tpu_custom_call.1} parent=47 // pred_fallthru
          _
        %s427 = sand.u32 %s32, 1
        %s428 = scalar_lea.sflag [#allocation12], %s427
        %s429 = sand.u32 %s181, 1
        %s430 = smul.addr %s429, 512
        %s431 = scalar_lea.vmem [#allocation13], %s430
        // Predicated region
        $region73: #{tpu_custom_call.1} parent=47 // pred_check
          %p432 = pneg %p194
        $region74: #{tpu_custom_call.1} parent=47 // pred_check_branch
          %434 = sbr.rel (%p432) target = $region76
        $region75: #{tpu_custom_call.1} parent=47 // pred_region
          %435 = dma.done %s428, 8192
        $region76: #{tpu_custom_call.1} parent=47 // pred_fallthru
          _
        %p436 = pneg %p48
        %p437 = pneg %p45
        %p438 = pneg %p69
        %p439 = pneg %p66
        %p440 = pneg %p90
        %p441 = pneg %p87
        %s442 = sand.u32 %s32, 1
        %s443 = scalar_lea.sflag [#allocation9], %s442
        %s444 = sand.u32 %s103, 1
        %s445 = smul.addr %s444, 768
        %s446 = scalar_lea.vmem [#allocation8], %s445
        %p447 = pneg %p116
        %p448 = pneg %p113
        %s449 = sand.u32 %s32, 1
        %s450 = scalar_lea.sflag [#allocation9], %s449
        %s451 = sand.u32 %s129, 1
        %s452 = smul.addr %s451, 32
        %s453 = scalar_lea.vmem [#allocation10], %s452
        %p454 = pneg %p142
        %p455 = pneg %p139
        %s456 = sand.u32 %s32, 1
        %s457 = scalar_lea.sflag [#allocation12], %s456
        %s458 = sand.u32 %s155, 1
        %s459 = smul.addr %s458, 512
        %s460 = scalar_lea.vmem [#allocation11], %s459
        %p461 = pneg %p168
        %p462 = pneg %p165
        %s463 = sand.u32 %s32, 1
        %s464 = scalar_lea.sflag [#allocation12], %s463
        %s465 = sand.u32 %s181, 1
        %s466 = smul.addr %s465, 512
        %s467 = scalar_lea.vmem [#allocation13], %s466
        %p468 = pneg %p194
        %p469 = pneg %p191
        %p470 = pneg %p215
        %p471 = pneg %p212
        %p472 = pneg %p241
        %p473 = pneg %p238
        %s474 = sand.u32 %s228, 1
        %s475 = scalar_lea.sflag [#allocation16], %s474
        %s476 = sand.u32 %s228, 1
        %s477 = smul.addr %s476, 32
        %s478 = scalar_lea.vmem [#allocation15], %s477
        %p480 = scmp.eq.s32.totalorder %s32, 0
        // Predicated region
        $region77: #{tpu_custom_call.1} parent=47 // pred_check
          %p481 = pneg %p480
        $region78: #{tpu_custom_call.1} parent=47 // pred_check_branch
          %483 = sbr.rel (%p481) target = $region80
        $region79: #{tpu_custom_call.1} parent=47 // pred_region
          %v484 = vld [vmem:[#allocation2] sm:$0xff]
          %v485 = vld [vmem:[#allocation2 + $0x8] sm:$0xff]
          %v486 = vld [vmem:[#allocation2 + $0x10] sm:$0xff]
          %v487 = vld [vmem:[#allocation2 + $0x18] sm:$0xff]
          %v488 = vld [vmem:[#allocation2 + $0x20] sm:$0xff]
          %v489 = vld [vmem:[#allocation2 + $0x28] sm:$0xff]
          %v490 = vld [vmem:[#allocation2 + $0x30] sm:$0xff]
          %v491 = vld [vmem:[#allocation2 + $0x38] sm:$0xff]
          %492 = vst [vmem:[#allocation14] sm:$0xff] %v484
          %493 = vst [vmem:[#allocation14 + $0x8] sm:$0xff] %v485
          %494 = vst [vmem:[#allocation14 + $0x10] sm:$0xff] %v486
          %495 = vst [vmem:[#allocation14 + $0x18] sm:$0xff] %v487
          %496 = vst [vmem:[#allocation14 + $0x20] sm:$0xff] %v488
          %497 = vst [vmem:[#allocation14 + $0x28] sm:$0xff] %v489
          %498 = vst [vmem:[#allocation14 + $0x30] sm:$0xff] %v490
          %499 = vst [vmem:[#allocation14 + $0x38] sm:$0xff] %v491
        $region80: #{tpu_custom_call.1} parent=47 // pred_fallthru
          _
        %v500 = vld [vmem:[#allocation14] sm:$0xff]
        %v501 = vld [vmem:[#allocation14 + $0x8] sm:$0xff]
        %v502 = vld [vmem:[#allocation14 + $0x10] sm:$0xff]
        %v503 = vld [vmem:[#allocation14 + $0x18] sm:$0xff]
        %v504 = vld [vmem:[#allocation14 + $0x20] sm:$0xff]
        %v505 = vld [vmem:[#allocation14 + $0x28] sm:$0xff]
        %v506 = vld [vmem:[#allocation14 + $0x30] sm:$0xff]
        %v507 = vld [vmem:[#allocation14 + $0x38] sm:$0xff]
        %v508 = vpack.c.bf16 %v502, %v500
        %v509 = vpack.c.bf16 %v503, %v501
        %v510 = vpack.c.bf16 %v506, %v504
        %v511 = vpack.c.bf16 %v507, %v505
        %v512 = vld [vmem:[%s413] sm:$0xff]
        %v513 = vld [vmem:[%s413 + $0x8] sm:$0xff]
        %v514 = vld [vmem:[%s413 + $0x10] sm:$0xff]
        %v515 = vld [vmem:[%s413 + $0x18] sm:$0xff]
        %v516 = vld [vmem:[%s404] sm:$0xff]
        %v517 = vld [vmem:[%s404 + $0x8] sm:$0xff]
        %v518 = vld [vmem:[%s404 + $0x10] sm:$0xff]
        %v519 = vld [vmem:[%s404 + $0x18] sm:$0xff]
        %v520 = vld [vmem:[%s404 + $0x20] sm:$0xff]
        %v521 = vld [vmem:[%s404 + $0x28] sm:$0xff]
        %v522 = vld [vmem:[%s404 + $0x30] sm:$0xff]
        %v523 = vld [vmem:[%s404 + $0x38] sm:$0xff]
        %v524 = vld [vmem:[%s404 + $0x40] sm:$0xff]
        %v525 = vld [vmem:[%s404 + $0x48] sm:$0xff]
        %v526 = vld [vmem:[%s404 + $0x50] sm:$0xff]
        %v527 = vld [vmem:[%s404 + $0x58] sm:$0xff]
        %v528 = vld [vmem:[%s404 + $0x60] sm:$0xff]
        %v529 = vld [vmem:[%s404 + $0x68] sm:$0xff]
        %v530 = vld [vmem:[%s404 + $0x70] sm:$0xff]
        %v531 = vld [vmem:[%s404 + $0x78] sm:$0xff]
        %v532 = vld [vmem:[%s404 + $0x80] sm:$0xff]
        %v533 = vld [vmem:[%s404 + $0x88] sm:$0xff]
        %v534 = vld [vmem:[%s404 + $0x90] sm:$0xff]
        %v535 = vld [vmem:[%s404 + $0x98] sm:$0xff]
        %v536 = vld [vmem:[%s404 + $0xa0] sm:$0xff]
        %v537 = vld [vmem:[%s404 + $0xa8] sm:$0xff]
        %v538 = vld [vmem:[%s404 + $0xb0] sm:$0xff]
        %v539 = vld [vmem:[%s404 + $0xb8] sm:$0xff]
        %v540 = vld [vmem:[%s404 + $0xc0] sm:$0xff]
        %v541 = vld [vmem:[%s404 + $0xc8] sm:$0xff]
        %v542 = vld [vmem:[%s404 + $0xd0] sm:$0xff]
        %v543 = vld [vmem:[%s404 + $0xd8] sm:$0xff]
        %v544 = vld [vmem:[%s404 + $0xe0] sm:$0xff]
        %v545 = vld [vmem:[%s404 + $0xe8] sm:$0xff]
        %v546 = vld [vmem:[%s404 + $0xf0] sm:$0xff]
        %v547 = vld [vmem:[%s404 + $0xf8] sm:$0xff]
        %v548 = vld [vmem:[%s404 + $0x100] sm:$0xff]
        %v549 = vld [vmem:[%s404 + $0x108] sm:$0xff]
        %v550 = vld [vmem:[%s404 + $0x110] sm:$0xff]
        %v551 = vld [vmem:[%s404 + $0x118] sm:$0xff]
        %v552 = vld [vmem:[%s404 + $0x120] sm:$0xff]
        %v553 = vld [vmem:[%s404 + $0x128] sm:$0xff]
        %v554 = vld [vmem:[%s404 + $0x130] sm:$0xff]
        %v555 = vld [vmem:[%s404 + $0x138] sm:$0xff]
        %v556 = vld [vmem:[%s404 + $0x140] sm:$0xff]
        %v557 = vld [vmem:[%s404 + $0x148] sm:$0xff]
        %v558 = vld [vmem:[%s404 + $0x150] sm:$0xff]
        %v559 = vld [vmem:[%s404 + $0x158] sm:$0xff]
        %v560 = vld [vmem:[%s404 + $0x160] sm:$0xff]
        %v561 = vld [vmem:[%s404 + $0x168] sm:$0xff]
        %v562 = vld [vmem:[%s404 + $0x170] sm:$0xff]
        %v563 = vld [vmem:[%s404 + $0x178] sm:$0xff]
        %v564 = vld [vmem:[%s404 + $0x180] sm:$0xff]
        %v565 = vld [vmem:[%s404 + $0x188] sm:$0xff]
        %v566 = vld [vmem:[%s404 + $0x190] sm:$0xff]
        %v567 = vld [vmem:[%s404 + $0x198] sm:$0xff]
        %v568 = vld [vmem:[%s404 + $0x1a0] sm:$0xff]
        %v569 = vld [vmem:[%s404 + $0x1a8] sm:$0xff]
        %v570 = vld [vmem:[%s404 + $0x1b0] sm:$0xff]
        %v571 = vld [vmem:[%s404 + $0x1b8] sm:$0xff]
        %v572 = vld [vmem:[%s404 + $0x1c0] sm:$0xff]
        %v573 = vld [vmem:[%s404 + $0x1c8] sm:$0xff]
        %v574 = vld [vmem:[%s404 + $0x1d0] sm:$0xff]
        %v575 = vld [vmem:[%s404 + $0x1d8] sm:$0xff]
        %v576 = vld [vmem:[%s404 + $0x1e0] sm:$0xff]
        %v577 = vld [vmem:[%s404 + $0x1e8] sm:$0xff]
        %v578 = vld [vmem:[%s404 + $0x1f0] sm:$0xff]
        %v579 = vld [vmem:[%s404 + $0x1f8] sm:$0xff]
        %v580 = vld [vmem:[%s404 + $0x200] sm:$0xff]
        %v581 = vld [vmem:[%s404 + $0x208] sm:$0xff]
        %v582 = vld [vmem:[%s404 + $0x210] sm:$0xff]
        %v583 = vld [vmem:[%s404 + $0x218] sm:$0xff]
        %v584 = vld [vmem:[%s404 + $0x220] sm:$0xff]
        %v585 = vld [vmem:[%s404 + $0x228] sm:$0xff]
        %v586 = vld [vmem:[%s404 + $0x230] sm:$0xff]
        %v587 = vld [vmem:[%s404 + $0x238] sm:$0xff]
        %v588 = vld [vmem:[%s404 + $0x240] sm:$0xff]
        %v589 = vld [vmem:[%s404 + $0x248] sm:$0xff]
        %v590 = vld [vmem:[%s404 + $0x250] sm:$0xff]
        %v591 = vld [vmem:[%s404 + $0x258] sm:$0xff]
        %v592 = vld [vmem:[%s404 + $0x260] sm:$0xff]
        %v593 = vld [vmem:[%s404 + $0x268] sm:$0xff]
        %v594 = vld [vmem:[%s404 + $0x270] sm:$0xff]
        %v595 = vld [vmem:[%s404 + $0x278] sm:$0xff]
        %v596 = vld [vmem:[%s404 + $0x280] sm:$0xff]
        %v597 = vld [vmem:[%s404 + $0x288] sm:$0xff]
        %v598 = vld [vmem:[%s404 + $0x290] sm:$0xff]
        %v599 = vld [vmem:[%s404 + $0x298] sm:$0xff]
        %v600 = vld [vmem:[%s404 + $0x2a0] sm:$0xff]
        %v601 = vld [vmem:[%s404 + $0x2a8] sm:$0xff]
        %v602 = vld [vmem:[%s404 + $0x2b0] sm:$0xff]
        %v603 = vld [vmem:[%s404 + $0x2b8] sm:$0xff]
        %v604 = vld [vmem:[%s404 + $0x2c0] sm:$0xff]
        %v605 = vld [vmem:[%s404 + $0x2c8] sm:$0xff]
        %v606 = vld [vmem:[%s404 + $0x2d0] sm:$0xff]
        %v607 = vld [vmem:[%s404 + $0x2d8] sm:$0xff]
        %v608 = vld [vmem:[%s404 + $0x2e0] sm:$0xff]
        %v609 = vld [vmem:[%s404 + $0x2e8] sm:$0xff]
        %v610 = vld [vmem:[%s404 + $0x2f0] sm:$0xff]
        %v611 = vld [vmem:[%s404 + $0x2f8] sm:$0xff]
        %v708 = vunpack.c.l.b16 %v516
        %v709 = vunpack.c.h.b16 %v516
        %v710 = vunpack.c.l.b16 %v517
        %v711 = vunpack.c.h.b16 %v517
        %v712 = vunpack.c.l.b16 %v518
        %v713 = vunpack.c.h.b16 %v518
        %v714 = vunpack.c.l.b16 %v519
        %v715 = vunpack.c.h.b16 %v519
        %v716 = vunpack.c.l.b16 %v520
        %v717 = vunpack.c.h.b16 %v520
        %v718 = vunpack.c.l.b16 %v521
        %v719 = vunpack.c.h.b16 %v521
        %v720 = vunpack.c.l.b16 %v522
        %v721 = vunpack.c.h.b16 %v522
        %v722 = vunpack.c.l.b16 %v523
        %v723 = vunpack.c.h.b16 %v523
        %v724 = vunpack.c.l.b16 %v524
        %v725 = vunpack.c.h.b16 %v524
        %v726 = vunpack.c.l.b16 %v525
        %v727 = vunpack.c.h.b16 %v525
        %v728 = vunpack.c.l.b16 %v526
        %v729 = vunpack.c.h.b16 %v526
        %v730 = vunpack.c.l.b16 %v527
        %v731 = vunpack.c.h.b16 %v527
        %v732 = vunpack.c.l.b16 %v528
        %v733 = vunpack.c.h.b16 %v528
        %v734 = vunpack.c.l.b16 %v529
        %v735 = vunpack.c.h.b16 %v529
        %v736 = vunpack.c.l.b16 %v530
        %v737 = vunpack.c.h.b16 %v530
        %v738 = vunpack.c.l.b16 %v531
        %v739 = vunpack.c.h.b16 %v531
        %v740 = vunpack.c.l.b16 %v532
        %v741 = vunpack.c.h.b16 %v532
        %v742 = vunpack.c.l.b16 %v533
        %v743 = vunpack.c.h.b16 %v533
        %v744 = vunpack.c.l.b16 %v534
        %v745 = vunpack.c.h.b16 %v534
        %v746 = vunpack.c.l.b16 %v535
        %v747 = vunpack.c.h.b16 %v535
        %v748 = vunpack.c.l.b16 %v536
        %v749 = vunpack.c.h.b16 %v536
        %v750 = vunpack.c.l.b16 %v537
        %v751 = vunpack.c.h.b16 %v537
        %v752 = vunpack.c.l.b16 %v538
        %v753 = vunpack.c.h.b16 %v538
        %v754 = vunpack.c.l.b16 %v539
        %v755 = vunpack.c.h.b16 %v539
        %v756 = vunpack.c.l.b16 %v540
        %v757 = vunpack.c.h.b16 %v540
        %v758 = vunpack.c.l.b16 %v541
        %v759 = vunpack.c.h.b16 %v541
        %v760 = vunpack.c.l.b16 %v542
        %v761 = vunpack.c.h.b16 %v542
        %v762 = vunpack.c.l.b16 %v543
        %v763 = vunpack.c.h.b16 %v543
        %v764 = vunpack.c.l.b16 %v544
        %v765 = vunpack.c.h.b16 %v544
        %v766 = vunpack.c.l.b16 %v545
        %v767 = vunpack.c.h.b16 %v545
        %v768 = vunpack.c.l.b16 %v546
        %v769 = vunpack.c.h.b16 %v546
        %v770 = vunpack.c.l.b16 %v547
        %v771 = vunpack.c.h.b16 %v547
        %v772 = vunpack.c.l.b16 %v548
        %v773 = vunpack.c.h.b16 %v548
        %v774 = vunpack.c.l.b16 %v549
        %v775 = vunpack.c.h.b16 %v549
        %v776 = vunpack.c.l.b16 %v550
        %v777 = vunpack.c.h.b16 %v550
        %v778 = vunpack.c.l.b16 %v551
        %v779 = vunpack.c.h.b16 %v551
        %v780 = vunpack.c.l.b16 %v552
        %v781 = vunpack.c.h.b16 %v552
        %v782 = vunpack.c.l.b16 %v553
        %v783 = vunpack.c.h.b16 %v553
        %v784 = vunpack.c.l.b16 %v554
        %v785 = vunpack.c.h.b16 %v554
        %v786 = vunpack.c.l.b16 %v555
        %v787 = vunpack.c.h.b16 %v555
        %v788 = vunpack.c.l.b16 %v556
        %v789 = vunpack.c.h.b16 %v556
        %v790 = vunpack.c.l.b16 %v557
        %v791 = vunpack.c.h.b16 %v557
        %v792 = vunpack.c.l.b16 %v558
        %v793 = vunpack.c.h.b16 %v558
        %v794 = vunpack.c.l.b16 %v559
        %v795 = vunpack.c.h.b16 %v559
        %v796 = vunpack.c.l.b16 %v560
        %v797 = vunpack.c.h.b16 %v560
        %v798 = vunpack.c.l.b16 %v561
        %v799 = vunpack.c.h.b16 %v561
        %v800 = vunpack.c.l.b16 %v562
        %v801 = vunpack.c.h.b16 %v562
        %v802 = vunpack.c.l.b16 %v563
        %v803 = vunpack.c.h.b16 %v563
        %v804 = vunpack.c.l.b16 %v564
        %v805 = vunpack.c.h.b16 %v564
        %v806 = vunpack.c.l.b16 %v565
        %v807 = vunpack.c.h.b16 %v565
        %v808 = vunpack.c.l.b16 %v566
        %v809 = vunpack.c.h.b16 %v566
        %v810 = vunpack.c.l.b16 %v567
        %v811 = vunpack.c.h.b16 %v567
        %v812 = vunpack.c.l.b16 %v568
        %v813 = vunpack.c.h.b16 %v568
        %v814 = vunpack.c.l.b16 %v569
        %v815 = vunpack.c.h.b16 %v569
        %v816 = vunpack.c.l.b16 %v570
        %v817 = vunpack.c.h.b16 %v570
        %v818 = vunpack.c.l.b16 %v571
        %v819 = vunpack.c.h.b16 %v571
        %v820 = vunpack.c.l.b16 %v572
        %v821 = vunpack.c.h.b16 %v572
        %v822 = vunpack.c.l.b16 %v573
        %v823 = vunpack.c.h.b16 %v573
        %v824 = vunpack.c.l.b16 %v574
        %v825 = vunpack.c.h.b16 %v574
        %v826 = vunpack.c.l.b16 %v575
        %v827 = vunpack.c.h.b16 %v575
        %v828 = vunpack.c.l.b16 %v576
        %v829 = vunpack.c.h.b16 %v576
        %v830 = vunpack.c.l.b16 %v577
        %v831 = vunpack.c.h.b16 %v577
        %v832 = vunpack.c.l.b16 %v578
        %v833 = vunpack.c.h.b16 %v578
        %v834 = vunpack.c.l.b16 %v579
        %v835 = vunpack.c.h.b16 %v579
        %v836 = vunpack.c.l.b16 %v580
        %v837 = vunpack.c.h.b16 %v580
        %v838 = vunpack.c.l.b16 %v581
        %v839 = vunpack.c.h.b16 %v581
        %v840 = vunpack.c.l.b16 %v582
        %v841 = vunpack.c.h.b16 %v582
        %v842 = vunpack.c.l.b16 %v583
        %v843 = vunpack.c.h.b16 %v583
        %v844 = vunpack.c.l.b16 %v584
        %v845 = vunpack.c.h.b16 %v584
        %v846 = vunpack.c.l.b16 %v585
        %v847 = vunpack.c.h.b16 %v585
        %v848 = vunpack.c.l.b16 %v586
        %v849 = vunpack.c.h.b16 %v586
        %v850 = vunpack.c.l.b16 %v587
        %v851 = vunpack.c.h.b16 %v587
        %v852 = vunpack.c.l.b16 %v588
        %v853 = vunpack.c.h.b16 %v588
        %v854 = vunpack.c.l.b16 %v589
        %v855 = vunpack.c.h.b16 %v589
        %v856 = vunpack.c.l.b16 %v590
        %v857 = vunpack.c.h.b16 %v590
        %v858 = vunpack.c.l.b16 %v591
        %v859 = vunpack.c.h.b16 %v591
        %v860 = vunpack.c.l.b16 %v592
        %v861 = vunpack.c.h.b16 %v592
        %v862 = vunpack.c.l.b16 %v593
        %v863 = vunpack.c.h.b16 %v593
        %v864 = vunpack.c.l.b16 %v594
        %v865 = vunpack.c.h.b16 %v594
        %v866 = vunpack.c.l.b16 %v595
        %v867 = vunpack.c.h.b16 %v595
        %v868 = vunpack.c.l.b16 %v596
        %v869 = vunpack.c.h.b16 %v596
        %v870 = vunpack.c.l.b16 %v597
        %v871 = vunpack.c.h.b16 %v597
        %v872 = vunpack.c.l.b16 %v598
        %v873 = vunpack.c.h.b16 %v598
        %v874 = vunpack.c.l.b16 %v599
        %v875 = vunpack.c.h.b16 %v599
        %v876 = vunpack.c.l.b16 %v600
        %v877 = vunpack.c.h.b16 %v600
        %v878 = vunpack.c.l.b16 %v601
        %v879 = vunpack.c.h.b16 %v601
        %v880 = vunpack.c.l.b16 %v602
        %v881 = vunpack.c.h.b16 %v602
        %v882 = vunpack.c.l.b16 %v603
        %v883 = vunpack.c.h.b16 %v603
        %v884 = vunpack.c.l.b16 %v604
        %v885 = vunpack.c.h.b16 %v604
        %v886 = vunpack.c.l.b16 %v605
        %v887 = vunpack.c.h.b16 %v605
        %v888 = vunpack.c.l.b16 %v606
        %v889 = vunpack.c.h.b16 %v606
        %v890 = vunpack.c.l.b16 %v607
        %v891 = vunpack.c.h.b16 %v607
        %v892 = vunpack.c.l.b16 %v608
        %v893 = vunpack.c.h.b16 %v608
        %v894 = vunpack.c.l.b16 %v609
        %v895 = vunpack.c.h.b16 %v609
        %v896 = vunpack.c.l.b16 %v610
        %v897 = vunpack.c.h.b16 %v610
        %v898 = vunpack.c.l.b16 %v611
        %v899 = vunpack.c.h.b16 %v611
        %v900 = vpack.c.b16 %v714, %v708
        %v901 = vpack.c.b16 %v715, %v709
        %v902 = vpack.c.b16 %v716, %v710
        %v903 = vpack.c.b16 %v717, %v711
        %v904 = vpack.c.b16 %v718, %v712
        %v905 = vpack.c.b16 %v719, %v713
        %v906 = vpack.c.b16 %v726, %v720
        %v907 = vpack.c.b16 %v727, %v721
        %v908 = vpack.c.b16 %v728, %v722
        %v909 = vpack.c.b16 %v729, %v723
        %v910 = vpack.c.b16 %v730, %v724
        %v911 = vpack.c.b16 %v731, %v725
        %v912 = vpack.c.b16 %v738, %v732
        %v913 = vpack.c.b16 %v739, %v733
        %v914 = vpack.c.b16 %v740, %v734
        %v915 = vpack.c.b16 %v741, %v735
        %v916 = vpack.c.b16 %v742, %v736
        %v917 = vpack.c.b16 %v743, %v737
        %v918 = vpack.c.b16 %v750, %v744
        %v919 = vpack.c.b16 %v751, %v745
        %v920 = vpack.c.b16 %v752, %v746
        %v921 = vpack.c.b16 %v753, %v747
        %v922 = vpack.c.b16 %v754, %v748
        %v923 = vpack.c.b16 %v755, %v749
        %v924 = vpack.c.b16 %v762, %v756
        %v925 = vpack.c.b16 %v763, %v757
        %v926 = vpack.c.b16 %v764, %v758
        %v927 = vpack.c.b16 %v765, %v759
        %v928 = vpack.c.b16 %v766, %v760
        %v929 = vpack.c.b16 %v767, %v761
        %v930 = vpack.c.b16 %v774, %v768
        %v931 = vpack.c.b16 %v775, %v769
        %v932 = vpack.c.b16 %v776, %v770
        %v933 = vpack.c.b16 %v777, %v771
        %v934 = vpack.c.b16 %v778, %v772
        %v935 = vpack.c.b16 %v779, %v773
        %v936 = vpack.c.b16 %v786, %v780
        %v937 = vpack.c.b16 %v787, %v781
        %v938 = vpack.c.b16 %v788, %v782
        %v939 = vpack.c.b16 %v789, %v783
        %v940 = vpack.c.b16 %v790, %v784
        %v941 = vpack.c.b16 %v791, %v785
        %v942 = vpack.c.b16 %v798, %v792
        %v943 = vpack.c.b16 %v799, %v793
        %v944 = vpack.c.b16 %v800, %v794
        %v945 = vpack.c.b16 %v801, %v795
        %v946 = vpack.c.b16 %v802, %v796
        %v947 = vpack.c.b16 %v803, %v797
        %v948 = vpack.c.b16 %v810, %v804
        %v949 = vpack.c.b16 %v811, %v805
        %v950 = vpack.c.b16 %v812, %v806
        %v951 = vpack.c.b16 %v813, %v807
        %v952 = vpack.c.b16 %v814, %v808
        %v953 = vpack.c.b16 %v815, %v809
        %v954 = vpack.c.b16 %v822, %v816
        %v955 = vpack.c.b16 %v823, %v817
        %v956 = vpack.c.b16 %v824, %v818
        %v957 = vpack.c.b16 %v825, %v819
        %v958 = vpack.c.b16 %v826, %v820
        %v959 = vpack.c.b16 %v827, %v821
        %v960 = vpack.c.b16 %v834, %v828
        %v961 = vpack.c.b16 %v835, %v829
        %v962 = vpack.c.b16 %v836, %v830
        %v963 = vpack.c.b16 %v837, %v831
        %v964 = vpack.c.b16 %v838, %v832
        %v965 = vpack.c.b16 %v839, %v833
        %v966 = vpack.c.b16 %v846, %v840
        %v967 = vpack.c.b16 %v847, %v841
        %v968 = vpack.c.b16 %v848, %v842
        %v969 = vpack.c.b16 %v849, %v843
        %v970 = vpack.c.b16 %v850, %v844
        %v971 = vpack.c.b16 %v851, %v845
        %v972 = vpack.c.b16 %v858, %v852
        %v973 = vpack.c.b16 %v859, %v853
        %v974 = vpack.c.b16 %v860, %v854
        %v975 = vpack.c.b16 %v861, %v855
        %v976 = vpack.c.b16 %v862, %v856
        %v977 = vpack.c.b16 %v863, %v857
        %v978 = vpack.c.b16 %v870, %v864
        %v979 = vpack.c.b16 %v871, %v865
        %v980 = vpack.c.b16 %v872, %v866
        %v981 = vpack.c.b16 %v873, %v867
        %v982 = vpack.c.b16 %v874, %v868
        %v983 = vpack.c.b16 %v875, %v869
        %v984 = vpack.c.b16 %v882, %v876
        %v985 = vpack.c.b16 %v883, %v877
        %v986 = vpack.c.b16 %v884, %v878
        %v987 = vpack.c.b16 %v885, %v879
        %v988 = vpack.c.b16 %v886, %v880
        %v989 = vpack.c.b16 %v887, %v881
        %v990 = vpack.c.b16 %v894, %v888
        %v991 = vpack.c.b16 %v895, %v889
        %v992 = vpack.c.b16 %v896, %v890
        %v993 = vpack.c.b16 %v897, %v891
        %v994 = vpack.c.b16 %v898, %v892
        %v995 = vpack.c.b16 %v899, %v893
        %1092 = vmatprep.subr.bf16.mxu0 %v901
        %1093 = vmatpush1.bf16.msra.mxu0 %v900
        %1094 = vmatprep.subr.bf16.mxu0 %v907
        %1095 = vmatpush1.bf16.msra.mxu0 %v906
        %1096 = vmatprep.subr.bf16.mxu0 %v913
        %1097 = vmatpush1.bf16.msra.mxu0 %v912
        %1098 = vmatprep.subr.bf16.mxu0 %v919
        %1099 = vmatpush1.bf16.msra.mxu0 %v918
        %1100 = vmatprep.subr.bf16.mxu0 %v925
        %1101 = vmatpush1.bf16.msra.mxu0 %v924
        %1102 = vmatprep.subr.bf16.mxu0 %v931
        %1103 = vmatpush1.bf16.msra.mxu0 %v930
        %1104 = vmatprep.subr.bf16.mxu0 %v937
        %1105 = vmatpush1.bf16.msra.mxu0 %v936
        %1106 = vmatprep.subr.bf16.mxu0 %v943
        %1107 = vmatpush1.bf16.msra.mxu0 %v942
        %1108 = vmatprep.subr.bf16.mxu0 %v949
        %1109 = vmatpush1.bf16.msra.mxu0 %v948
        %1110 = vmatprep.subr.bf16.mxu0 %v955
        %1111 = vmatpush1.bf16.msra.mxu0 %v954
        %1112 = vmatprep.subr.bf16.mxu0 %v961
        %1113 = vmatpush1.bf16.msra.mxu0 %v960
        %1114 = vmatprep.subr.bf16.mxu0 %v967
        %1115 = vmatpush1.bf16.msra.mxu0 %v966
        %1116 = vmatprep.subr.bf16.mxu0 %v973
        %1117 = vmatpush1.bf16.msra.mxu0 %v972
        %1118 = vmatprep.subr.bf16.mxu0 %v979
        %1119 = vmatpush1.bf16.msra.mxu0 %v978
        %1120 = vmatprep.subr.bf16.mxu0 %v985
        %1121 = vmatpush1.bf16.msra.mxu0 %v984
        %1122 = vmatprep.subr.bf16.mxu0 %v991
        %1123 = vmatpush1.bf16.msra.mxu0 %v990
        %1124 = vmatprep.mubr.bf16.mxu0 %v509
        %1125 = vmatmul.mubr.bf16.gmra.mrb[0].mxu0 %v508
        %v1126 = vpop.f32.mrb[0].mxu0
        %v1127 = vadd.f32 0.0, %v1126
        %v1128 = vpop.f32.mrb[0].mxu0
        %v1129 = vadd.f32 0.0, %v1128
        %v1130 = vpop.f32.mrb[0].mxu0
        %v1131 = vadd.f32 0.0, %v1130
        %v1132 = vpop.f32.mrb[0].mxu0
        %v1133 = vadd.f32 0.0, %v1132
        %1134 = vmatprep.mubr.bf16.mxu0 %v511
        %1135 = vmatmul.mubr.bf16.gmra.mrb[0].mxu0 %v510
        %v1136 = vpop.f32.mrb[0].mxu0
        %v1137 = vadd.f32 0.0, %v1136
        %v1138 = vpop.f32.mrb[0].mxu0
        %v1139 = vadd.f32 0.0, %v1138
        %v1140 = vpop.f32.mrb[0].mxu0
        %v1141 = vadd.f32 0.0, %v1140
        %v1142 = vpop.f32.mrb[0].mxu0
        %v1143 = vadd.f32 0.0, %v1142
        %1144 = vdwg.mxu0
        %1145 = vmatprep.subr.bf16.mxu0 %v903
        %1146 = vmatpush1.bf16.msra.mxu0 %v902
        %1147 = vmatprep.subr.bf16.mxu0 %v909
        %1148 = vmatpush1.bf16.msra.mxu0 %v908
        %1149 = vmatprep.subr.bf16.mxu0 %v915
        %1150 = vmatpush1.bf16.msra.mxu0 %v914
        %1151 = vmatprep.subr.bf16.mxu0 %v921
        %1152 = vmatpush1.bf16.msra.mxu0 %v920
        %1153 = vmatprep.subr.bf16.mxu0 %v927
        %1154 = vmatpush1.bf16.msra.mxu0 %v926
        %1155 = vmatprep.subr.bf16.mxu0 %v933
        %1156 = vmatpush1.bf16.msra.mxu0 %v932
        %1157 = vmatprep.subr.bf16.mxu0 %v939
        %1158 = vmatpush1.bf16.msra.mxu0 %v938
        %1159 = vmatprep.subr.bf16.mxu0 %v945
        %1160 = vmatpush1.bf16.msra.mxu0 %v944
        %1161 = vmatprep.subr.bf16.mxu0 %v951
        %1162 = vmatpush1.bf16.msra.mxu0 %v950
        %1163 = vmatprep.subr.bf16.mxu0 %v957
        %1164 = vmatpush1.bf16.msra.mxu0 %v956
        %1165 = vmatprep.subr.bf16.mxu0 %v963
        %1166 = vmatpush1.bf16.msra.mxu0 %v962
        %1167 = vmatprep.subr.bf16.mxu0 %v969
        %1168 = vmatpush1.bf16.msra.mxu0 %v968
        %1169 = vmatprep.subr.bf16.mxu0 %v975
        %1170 = vmatpush1.bf16.msra.mxu0 %v974
        %1171 = vmatprep.subr.bf16.mxu0 %v981
        %1172 = vmatpush1.bf16.msra.mxu0 %v980
        %1173 = vmatprep.subr.bf16.mxu0 %v987
        %1174 = vmatpush1.bf16.msra.mxu0 %v986
        %1175 = vmatprep.subr.bf16.mxu0 %v993
        %1176 = vmatpush1.bf16.msra.mxu0 %v992
        %1177 = vmatprep.mubr.bf16.mxu0 %v509
        %1178 = vmatmul.mubr.bf16.gmra.mrb[0].mxu0 %v508
        %v1179 = vpop.f32.mrb[0].mxu0
        %v1180 = vadd.f32 0.0, %v1179
        %v1181 = vpop.f32.mrb[0].mxu0
        %v1182 = vadd.f32 0.0, %v1181
        %v1183 = vpop.f32.mrb[0].mxu0
        %v1184 = vadd.f32 0.0, %v1183
        %v1185 = vpop.f32.mrb[0].mxu0
        %v1186 = vadd.f32 0.0, %v1185
        %1187 = vmatprep.mubr.bf16.mxu0 %v511
        %1188 = vmatmul.mubr.bf16.gmra.mrb[0].mxu0 %v510
        %v1189 = vpop.f32.mrb[0].mxu0
        %v1190 = vadd.f32 0.0, %v1189
        %v1191 = vpop.f32.mrb[0].mxu0
        %v1192 = vadd.f32 0.0, %v1191
        %v1193 = vpop.f32.mrb[0].mxu0
        %v1194 = vadd.f32 0.0, %v1193
        %v1195 = vpop.f32.mrb[0].mxu0
        %v1196 = vadd.f32 0.0, %v1195
        %1197 = vdwg.mxu0
        %1198 = vmatprep.subr.bf16.mxu0 %v905
        %1199 = vmatpush1.bf16.msra.mxu0 %v904
        %1200 = vmatprep.subr.bf16.mxu0 %v911
        %1201 = vmatpush1.bf16.msra.mxu0 %v910
        %1202 = vmatprep.subr.bf16.mxu0 %v917
        %1203 = vmatpush1.bf16.msra.mxu0 %v916
        %1204 = vmatprep.subr.bf16.mxu0 %v923
        %1205 = vmatpush1.bf16.msra.mxu0 %v922
        %1206 = vmatprep.subr.bf16.mxu0 %v929
        %1207 = vmatpush1.bf16.msra.mxu0 %v928
        %1208 = vmatprep.subr.bf16.mxu0 %v935
        %1209 = vmatpush1.bf16.msra.mxu0 %v934
        %1210 = vmatprep.subr.bf16.mxu0 %v941
        %1211 = vmatpush1.bf16.msra.mxu0 %v940
        %1212 = vmatprep.subr.bf16.mxu0 %v947
        %1213 = vmatpush1.bf16.msra.mxu0 %v946
        %1214 = vmatprep.subr.bf16.mxu0 %v953
        %1215 = vmatpush1.bf16.msra.mxu0 %v952
        %1216 = vmatprep.subr.bf16.mxu0 %v959
        %1217 = vmatpush1.bf16.msra.mxu0 %v958
        %1218 = vmatprep.subr.bf16.mxu0 %v965
        %1219 = vmatpush1.bf16.msra.mxu0 %v964
        %1220 = vmatprep.subr.bf16.mxu0 %v971
        %1221 = vmatpush1.bf16.msra.mxu0 %v970
        %1222 = vmatprep.subr.bf16.mxu0 %v977
        %1223 = vmatpush1.bf16.msra.mxu0 %v976
        %1224 = vmatprep.subr.bf16.mxu0 %v983
        %1225 = vmatpush1.bf16.msra.mxu0 %v982
        %1226 = vmatprep.subr.bf16.mxu0 %v989
        %1227 = vmatpush1.bf16.msra.mxu0 %v988
        %1228 = vmatprep.subr.bf16.mxu0 %v995
        %1229 = vmatpush1.bf16.msra.mxu0 %v994
        %1230 = vmatprep.mubr.bf16.mxu0 %v509
        %1231 = vmatmul.mubr.bf16.gmra.mrb[0].mxu0 %v508
        %v1232 = vpop.f32.mrb[0].mxu0
        %v1233 = vadd.f32 0.0, %v1232
        %v1234 = vpop.f32.mrb[0].mxu0
        %v1235 = vadd.f32 0.0, %v1234
        %v1236 = vpop.f32.mrb[0].mxu0
        %v1237 = vadd.f32 0.0, %v1236
        %v1238 = vpop.f32.mrb[0].mxu0
        %v1239 = vadd.f32 0.0, %v1238
        %1240 = vmatprep.mubr.bf16.mxu0 %v511
        %1241 = vmatmul.mubr.bf16.gmra.mrb[0].mxu0 %v510
        %v1242 = vpop.f32.mrb[0].mxu0
        %v1243 = vadd.f32 0.0, %v1242
        %v1244 = vpop.f32.mrb[0].mxu0
        %v1245 = vadd.f32 0.0, %v1244
        %v1246 = vpop.f32.mrb[0].mxu0
        %v1247 = vadd.f32 0.0, %v1246
        %v1248 = vpop.f32.mrb[0].mxu0
        %v1249 = vadd.f32 0.0, %v1248
        %1250 = vdwg.mxu0
        %v1251 = vpack.c.bf16 %v1131, %v1127
        %v1252 = vpack.c.bf16 %v1133, %v1129
        %v1253 = vpack.c.bf16 %v1141, %v1137
        %v1254 = vpack.c.bf16 %v1143, %v1139
        %v1255 = vpack.c.bf16 %v1184, %v1180
        %v1256 = vpack.c.bf16 %v1186, %v1182
        %v1257 = vpack.c.bf16 %v1194, %v1190
        %v1258 = vpack.c.bf16 %v1196, %v1192
        %1259 = vmatprep.subr.bf16.mxu0 %v1256
        %1260 = vmatpush1.bf16.xpose.msra.mxu0 %v1255
        %1261 = vmatprep.subr.bf16.mxu0 %v1258
        %1262 = vmatpush1.bf16.xpose.msra.mxu0 %v1257
        %1263 = vmatprep.subr.bf16.mxu0 0
        %1264 = vmatpush1.bf16.xpose.msra.mxu0 0
        %1265 = vmatprep.subr.bf16.mxu0 0
        %1266 = vmatpush1.bf16.xpose.msra.mxu0 0
        %1267 = vmatprep.subr.bf16.mxu0 0
        %1268 = vmatpush1.bf16.xpose.msra.mxu0 0
        %1269 = vmatprep.subr.bf16.mxu0 0
        %1270 = vmatpush1.bf16.xpose.msra.mxu0 0
        %1271 = vmatprep.subr.bf16.mxu0 0
        %1272 = vmatpush1.bf16.xpose.msra.mxu0 0
        %1273 = vmatprep.subr.bf16.mxu0 0
        %1274 = vmatpush1.bf16.xpose.msra.mxu0 0
        %1275 = vmatprep.subr.bf16.mxu0 0
        %1276 = vmatpush1.bf16.xpose.msra.mxu0 0
        %1277 = vmatprep.subr.bf16.mxu0 0
        %1278 = vmatpush1.bf16.xpose.msra.mxu0 0
        %1279 = vmatprep.subr.bf16.mxu0 0
        %1280 = vmatpush1.bf16.xpose.msra.mxu0 0
        %1281 = vmatprep.subr.bf16.mxu0 0
        %1282 = vmatpush1.bf16.xpose.msra.mxu0 0
        %1283 = vmatprep.subr.bf16.mxu0 0
        %1284 = vmatpush1.bf16.xpose.msra.mxu0 0
        %1285 = vmatprep.subr.bf16.mxu0 0
        %1286 = vmatpush1.bf16.xpose.msra.mxu0 0
        %1287 = vmatprep.subr.bf16.mxu0 0
        %1288 = vmatpush1.bf16.xpose.msra.mxu0 0
        %1289 = vmatprep.subr.bf16.mxu0 0
        %1290 = vmatpush1.bf16.xpose.msra.mxu0 0
        %1291 = vmatprep.mubr.bf16.mxu0 %v1252
        %1292 = vmatmul.mubr.bf16.gmra.mrb[0].mxu0 %v1251
        %v1293 = vpop.f32.mrb[0].mxu0
        %v1294 = vadd.f32 0.0, %v1293
        %v1295 = vpop.f32.mrb[0].mxu0
        %v1296 = vpop.f32.mrb[0].mxu0
        %v1297 = vadd.f32 0.0, %v1296
        %v1298 = vpop.f32.mrb[0].mxu0
        %1299 = vmatprep.mubr.bf16.mxu0 %v1254
        %1300 = vmatmul.mubr.bf16.gmra.mrb[0].mxu0 %v1253
        %v1301 = vpop.f32.mrb[0].mxu0
        %v1302 = vadd.f32 0.0, %v1301
        %v1303 = vpop.f32.mrb[0].mxu0
        %v1304 = vpop.f32.mrb[0].mxu0
        %v1305 = vadd.f32 0.0, %v1304
        %v1306 = vpop.f32.mrb[0].mxu0
        %1307 = vdwg.mxu0
        %v1308 = vmul.f32 %v1294, 0.17677669
        %v1309 = vmul.f32 %v1297, 0.17677669
        %v1310 = vmul.f32 %v1302, 0.17677669
        %v1311 = vmul.f32 %v1305, 0.17677669
        %v1312 = vld [vmem:[#allocation5] sm:$0xff]
        %v1313 = vld [vmem:[#allocation5 + $0x8] sm:$0xff]
        %v1314 = vld [vmem:[#allocation5 + $0x10] sm:$0xff]
        %v1315 = vld [vmem:[#allocation5 + $0x18] sm:$0xff]
        %v1316 = vadd.f32 %v1308, %v1312
        %v1317 = vadd.f32 %v1309, %v1313
        %v1318 = vadd.f32 %v1310, %v1314
        %v1319 = vadd.f32 %v1311, %v1315
        %vm1320 = vcmask 261120
        %v1321 = vsel %vm1320, %v1316, -inf
        %1322 = vmax.xlane.f32.xlu0 %v1321
        %v1323 = vpop.xlane.xlu0 %1322
        %v1324 = vsel %vm1320, %v1317, -inf
        %1325 = vmax.xlane.f32.xlu0 %v1324
        %v1326 = vpop.xlane.xlu0 %1325
        %v1327 = vsel %vm1320, %v1318, -inf
        %1328 = vmax.xlane.f32.xlu0 %v1327
        %v1329 = vpop.xlane.xlu0 %1328
        %v1330 = vsel %vm1320, %v1319, -inf
        %1331 = vmax.xlane.f32.xlu0 %v1330
        %v1332 = vpop.xlane.xlu0 %1331
        %v1333 = vsub.f32 %v1316, %v1323
        %v1334 = vsub.f32 %v1317, %v1326
        %v1335 = vsub.f32 %v1318, %v1329
        %v1336 = vsub.f32 %v1319, %v1332
        %v1337 = vmul.f32 %v1333, 1.442695
        %v1338 = vpow.pop %v1337
        %v1339 = vmul.f32 %v1334, 1.442695
        %v1340 = vpow.pop %v1339
        %v1341 = vmul.f32 %v1335, 1.442695
        %v1342 = vpow.pop %v1341
        %v1343 = vmul.f32 %v1336, 1.442695
        %v1344 = vpow.pop %v1343
        %v1345 = vsel %vm1320, %v1338, 0.0
        %1346 = vadd.xlane.f32.xlu0 %v1345
        %v1347 = vpop.xlane.xlu0 %1346
        %v1348 = vsel %vm1320, %v1340, 0.0
        %1349 = vadd.xlane.f32.xlu0 %v1348
        %v1350 = vpop.xlane.xlu0 %1349
        %v1351 = vsel %vm1320, %v1342, 0.0
        %1352 = vadd.xlane.f32.xlu0 %v1351
        %v1353 = vpop.xlane.xlu0 %1352
        %v1354 = vsel %vm1320, %v1344, 0.0
        %1355 = vadd.xlane.f32.xlu0 %v1354
        %v1356 = vpop.xlane.xlu0 %1355
        %v1357 = vrcp.pop %v1347
        %v1358 = vrcp.pop %v1350
        %v1359 = vrcp.pop %v1353
        %v1360 = vrcp.pop %v1356
        %v1361 = vmul.f32 %v1338, %v1357
        %v1362 = vmul.f32 %v1340, %v1358
        %v1363 = vmul.f32 %v1342, %v1359
        %v1364 = vmul.f32 %v1344, %v1360
        %v1365 = vpack.c.bf16 %v1362, %v1361
        %v1366 = vpack.c.bf16 %v1364, %v1363
        %v1367 = vld [vmem:[#allocation7] sm:$0xf]
        %v1368 = vld [vmem:[#allocation7 + $0x4] sm:$0xf]
        %v1369 = vld [vmem:[#allocation7 + $0x8] sm:$0xf]
        %v1370 = vld [vmem:[#allocation7 + $0xc] sm:$0xf]
        %v1375 = vunpack.c.l.b16 %v1367
        %v1376 = vunpack.c.l.b16 %v1368
        %v1377 = vunpack.c.l.b16 %v1369
        %v1378 = vunpack.c.l.b16 %v1370
        %v1379 = vpack.c.b16 %v1376, %v1375
        %v1380 = vpack.c.b16 %v1378, %v1377
        %v1384 = vsel %vm1320, %v1365, 0
        %v1387 = vsel %vm1320, %v1366, 0
        %1389 = vmatprep.subr.bf16.mxu0 0
        %1390 = vmatpush1.bf16.msra.mxu0 %v1379
        %1391 = vmatprep.subr.bf16.mxu0 0
        %1392 = vmatpush1.bf16.msra.mxu0 %v1380
        %1393 = vmatprep.subr.bf16.mxu0 0
        %1394 = vmatpush1.bf16.msra.mxu0 0
        %1395 = vmatprep.subr.bf16.mxu0 0
        %1396 = vmatpush1.bf16.msra.mxu0 0
        %1397 = vmatprep.subr.bf16.mxu0 0
        %1398 = vmatpush1.bf16.msra.mxu0 0
        %1399 = vmatprep.subr.bf16.mxu0 0
        %1400 = vmatpush1.bf16.msra.mxu0 0
        %1401 = vmatprep.subr.bf16.mxu0 0
        %1402 = vmatpush1.bf16.msra.mxu0 0
        %1403 = vmatprep.subr.bf16.mxu0 0
        %1404 = vmatpush1.bf16.msra.mxu0 0
        %1405 = vmatprep.subr.bf16.mxu0 0
        %1406 = vmatpush1.bf16.msra.mxu0 0
        %1407 = vmatprep.subr.bf16.mxu0 0
        %1408 = vmatpush1.bf16.msra.mxu0 0
        %1409 = vmatprep.subr.bf16.mxu0 0
        %1410 = vmatpush1.bf16.msra.mxu0 0
        %1411 = vmatprep.subr.bf16.mxu0 0
        %1412 = vmatpush1.bf16.msra.mxu0 0
        %1413 = vmatprep.subr.bf16.mxu0 0
        %1414 = vmatpush1.bf16.msra.mxu0 0
        %1415 = vmatprep.subr.bf16.mxu0 0
        %1416 = vmatpush1.bf16.msra.mxu0 0
        %1417 = vmatprep.subr.bf16.mxu0 0
        %1418 = vmatpush1.bf16.msra.mxu0 0
        %1419 = vmatprep.subr.bf16.mxu0 0
        %1420 = vmatpush1.bf16.msra.mxu0 0
        %1421 = vmatprep.mubr.bf16.mxu0 0
        %1422 = vmatmul.mubr.bf16.gmra.mrb[0].mxu0 %v1384
        %v1423 = vpop.f32.mrb[0].mxu0
        %v1424 = vadd.f32 0.0, %v1423
        %v1425 = vpop.f32.mrb[0].mxu0
        %v1426 = vpop.f32.mrb[0].mxu0
        %v1427 = vadd.f32 0.0, %v1426
        %v1428 = vpop.f32.mrb[0].mxu0
        %1429 = vmatprep.mubr.bf16.mxu0 0
        %1430 = vmatmul.mubr.bf16.gmra.mrb[0].mxu0 %v1387
        %v1431 = vpop.f32.mrb[0].mxu0
        %v1432 = vadd.f32 0.0, %v1431
        %v1433 = vpop.f32.mrb[0].mxu0
        %v1434 = vpop.f32.mrb[0].mxu0
        %v1435 = vadd.f32 0.0, %v1434
        %v1436 = vpop.f32.mrb[0].mxu0
        %1437 = vdwg.mxu0
        %1438 = vst [vmem:[%s478] sm:$0xff] %v1424
        %1439 = vst [vmem:[%s478 + $0x8] sm:$0xff] %v1427
        %1440 = vst [vmem:[%s478 + $0x10] sm:$0xff] %v1432
        %1441 = vst [vmem:[%s478 + $0x18] sm:$0xff] %v1435
        %v1442 = vpack.c.bf16 %v1237, %v1233
        %v1443 = vpack.c.bf16 %v1239, %v1235
        %v1444 = vpack.c.bf16 %v1247, %v1243
        %v1445 = vpack.c.bf16 %v1249, %v1245
        %v1446 = vlaneseq
        %v1447 = vshrl.u32 %v1446, 7
        %v1448 = vsub.s32 0, %v1447
        %v1449 = vrot.slane %v512, %v1448
        %v1450 = vlaneseq
        %v1451 = vshrl.u32 %v1450, 7
        %v1452 = vsub.s32 0, %v1451
        %v1453 = vrot.slane %v513, %v1452
        %1454 = vmatprep.subr.bf16.mxu0 %v1443
        %1455 = vmatpush1.bf16.msra.mxu0 %v1442
        %1456 = vmatprep.subr.bf16.mxu0 %v1445
        %1457 = vmatpush1.bf16.msra.mxu0 %v1444
        %1458 = vmatprep.subr.bf16.mxu0 0
        %1459 = vmatpush1.bf16.msra.mxu0 0
        %1460 = vmatprep.subr.bf16.mxu0 0
        %1461 = vmatpush1.bf16.msra.mxu0 0
        %1462 = vmatprep.subr.bf16.mxu0 0
        %1463 = vmatpush1.bf16.msra.mxu0 0
        %1464 = vmatprep.subr.bf16.mxu0 0
        %1465 = vmatpush1.bf16.msra.mxu0 0
        %1466 = vmatprep.subr.bf16.mxu0 0
        %1467 = vmatpush1.bf16.msra.mxu0 0
        %1468 = vmatprep.subr.bf16.mxu0 0
        %1469 = vmatpush1.bf16.msra.mxu0 0
        %1470 = vmatprep.subr.bf16.mxu0 0
        %1471 = vmatpush1.bf16.msra.mxu0 0
        %1472 = vmatprep.subr.bf16.mxu0 0
        %1473 = vmatpush1.bf16.msra.mxu0 0
        %1474 = vmatprep.subr.bf16.mxu0 0
        %1475 = vmatpush1.bf16.msra.mxu0 0
        %1476 = vmatprep.subr.bf16.mxu0 0
        %1477 = vmatpush1.bf16.msra.mxu0 0
        %1478 = vmatprep.subr.bf16.mxu0 0
        %1479 = vmatpush1.bf16.msra.mxu0 0
        %1480 = vmatprep.subr.bf16.mxu0 0
        %1481 = vmatpush1.bf16.msra.mxu0 0
        %1482 = vmatprep.subr.bf16.mxu0 0
        %1483 = vmatpush1.bf16.msra.mxu0 0
        %1484 = vmatprep.subr.bf16.mxu0 0
        %1485 = vmatpush1.bf16.msra.mxu0 0
        %1486 = vmatprep.mubr.bf16.mxu0 0
        %1487 = vmatmul.mubr.bf16.gmra.mrb[0].mxu0 %v1384
        %v1488 = vpop.f32.mrb[0].mxu0
        %v1489 = vadd.f32 %v1449, %v1488
        %v1490 = vpop.f32.mrb[0].mxu0
        %v1491 = vadd.f32 %v1453, %v1490
        %v1492 = vpop.f32.mrb[0].mxu0
        %v1493 = vadd.f32 %v1449, %v1492
        %v1494 = vpop.f32.mrb[0].mxu0
        %v1495 = vadd.f32 %v1453, %v1494
        %1496 = vmatprep.mubr.bf16.mxu0 0
        %1497 = vmatmul.mubr.bf16.gmra.mrb[0].mxu0 %v1387
        %v1498 = vpop.f32.mrb[0].mxu0
        %v1499 = vadd.f32 %v1449, %v1498
        %v1500 = vpop.f32.mrb[0].mxu0
        %v1501 = vadd.f32 %v1453, %v1500
        %v1502 = vpop.f32.mrb[0].mxu0
        %v1503 = vadd.f32 %v1449, %v1502
        %v1504 = vpop.f32.mrb[0].mxu0
        %v1505 = vadd.f32 %v1453, %v1504
        %1506 = vdwg.mxu0
        %v1507 = vadd.f32 %v500, %v1489
        %v1508 = vadd.f32 %v501, %v1491
        %v1509 = vadd.f32 %v502, %v1493
        %v1510 = vadd.f32 %v503, %v1495
        %v1511 = vadd.f32 %v504, %v1499
        %v1512 = vadd.f32 %v505, %v1501
        %v1513 = vadd.f32 %v506, %v1503
        %v1514 = vadd.f32 %v507, %v1505
        %v1515 = vadd.f32 %v1507, %v1508
        %1516 = vadd.xlane.f32.xlu0 %v1515
        %v1517 = vpop.xlane.xlu0 %1516
        %v1518 = vadd.f32 %v1509, %v1510
        %1519 = vadd.xlane.f32.xlu0 %v1518
        %v1520 = vpop.xlane.xlu0 %1519
        %v1521 = vadd.f32 %v1511, %v1512
        %1522 = vadd.xlane.f32.xlu0 %v1521
        %v1523 = vpop.xlane.xlu0 %1522
        %v1524 = vadd.f32 %v1513, %v1514
        %1525 = vadd.xlane.f32.xlu0 %v1524
        %v1526 = vpop.xlane.xlu0 %1525
        %v1527 = vrcp.pop 256.0
        %v1528 = vmul.f32 %v1517, %v1527
        %v1529 = vmul.f32 %v1520, %v1527
        %v1530 = vmul.f32 %v1523, %v1527
        %v1531 = vmul.f32 %v1526, %v1527
        %v1532 = vsub.f32 %v1507, %v1528
        %v1533 = vsub.f32 %v1508, %v1528
        %v1534 = vsub.f32 %v1509, %v1529
        %v1535 = vsub.f32 %v1510, %v1529
        %v1536 = vsub.f32 %v1511, %v1530
        %v1537 = vsub.f32 %v1512, %v1530
        %v1538 = vsub.f32 %v1513, %v1531
        %v1539 = vsub.f32 %v1514, %v1531
        %v1540 = vmul.f32 %v1532, %v1532
        %v1541 = vmul.f32 %v1533, %v1533
        %v1542 = vmul.f32 %v1534, %v1534
        %v1543 = vmul.f32 %v1535, %v1535
        %v1544 = vmul.f32 %v1536, %v1536
        %v1545 = vmul.f32 %v1537, %v1537
        %v1546 = vmul.f32 %v1538, %v1538
        %v1547 = vmul.f32 %v1539, %v1539
        %v1548 = vadd.f32 %v1540, %v1541
        %1549 = vadd.xlane.f32.xlu0 %v1548
        %v1550 = vpop.xlane.xlu0 %1549
        %v1551 = vadd.f32 %v1542, %v1543
        %1552 = vadd.xlane.f32.xlu0 %v1551
        %v1553 = vpop.xlane.xlu0 %1552
        %v1554 = vadd.f32 %v1544, %v1545
        %1555 = vadd.xlane.f32.xlu0 %v1554
        %v1556 = vpop.xlane.xlu0 %1555
        %v1557 = vadd.f32 %v1546, %v1547
        %1558 = vadd.xlane.f32.xlu0 %v1557
        %v1559 = vpop.xlane.xlu0 %1558
        %v1560 = vmul.f32 %v1550, %v1527
        %v1561 = vmul.f32 %v1553, %v1527
        %v1562 = vmul.f32 %v1556, %v1527
        %v1563 = vmul.f32 %v1559, %v1527
        %v1564 = vadd.f32 %v1560, 1e-05
        %v1565 = vadd.f32 %v1561, 1e-05
        %v1566 = vadd.f32 %v1562, 1e-05
        %v1567 = vadd.f32 %v1563, 1e-05
        %v1568 = vrsqrt.pop %v1564
        %v1569 = vrsqrt.pop %v1565
        %v1570 = vrsqrt.pop %v1566
        %v1571 = vrsqrt.pop %v1567
        %v1572 = vmul.f32 %v1532, %v1568
        %v1573 = vmul.f32 %v1533, %v1568
        %v1574 = vmul.f32 %v1534, %v1569
        %v1575 = vmul.f32 %v1535, %v1569
        %v1576 = vmul.f32 %v1536, %v1570
        %v1577 = vmul.f32 %v1537, %v1570
        %v1578 = vmul.f32 %v1538, %v1571
        %v1579 = vmul.f32 %v1539, %v1571
        %v1580 = vlaneseq
        %v1581 = vshrl.u32 %v1580, 7
        %v1582 = vsub.s32 1, %v1581
        %v1583 = vrot.slane %v512, %v1582
        %v1584 = vlaneseq
        %v1585 = vshrl.u32 %v1584, 7
        %v1586 = vsub.s32 1, %v1585
        %v1587 = vrot.slane %v513, %v1586
        %v1588 = vmul.f32 %v1572, %v1583
        %v1589 = vmul.f32 %v1573, %v1587
        %v1590 = vmul.f32 %v1574, %v1583
        %v1591 = vmul.f32 %v1575, %v1587
        %v1592 = vmul.f32 %v1576, %v1583
        %v1593 = vmul.f32 %v1577, %v1587
        %v1594 = vmul.f32 %v1578, %v1583
        %v1595 = vmul.f32 %v1579, %v1587
        %v1596 = vlaneseq
        %v1597 = vshrl.u32 %v1596, 7
        %v1598 = vsub.s32 2, %v1597
        %v1599 = vrot.slane %v512, %v1598
        %v1600 = vlaneseq
        %v1601 = vshrl.u32 %v1600, 7
        %v1602 = vsub.s32 2, %v1601
        %v1603 = vrot.slane %v513, %v1602
        %v1604 = vadd.f32 %v1588, %v1599
        %v1605 = vadd.f32 %v1589, %v1603
        %v1606 = vadd.f32 %v1590, %v1599
        %v1607 = vadd.f32 %v1591, %v1603
        %v1608 = vadd.f32 %v1592, %v1599
        %v1609 = vadd.f32 %v1593, %v1603
        %v1610 = vadd.f32 %v1594, %v1599
        %v1611 = vadd.f32 %v1595, %v1603
        %v1612 = vpack.c.bf16 %v1606, %v1604
        %v1613 = vpack.c.bf16 %v1607, %v1605
        %v1614 = vpack.c.bf16 %v1610, %v1608
        %v1615 = vpack.c.bf16 %v1611, %v1609
        %v1616 = vld [vmem:[%s422] sm:$0xff]
        %v1617 = vld [vmem:[%s422 + $0x8] sm:$0xff]
        %v1618 = vld [vmem:[%s422 + $0x10] sm:$0xff]
        %v1619 = vld [vmem:[%s422 + $0x18] sm:$0xff]
        %v1620 = vld [vmem:[%s422 + $0x20] sm:$0xff]
        %v1621 = vld [vmem:[%s422 + $0x28] sm:$0xff]
        %v1622 = vld [vmem:[%s422 + $0x30] sm:$0xff]
        %v1623 = vld [vmem:[%s422 + $0x38] sm:$0xff]
        %v1624 = vld [vmem:[%s422 + $0x40] sm:$0xff]
        %v1625 = vld [vmem:[%s422 + $0x48] sm:$0xff]
        %v1626 = vld [vmem:[%s422 + $0x50] sm:$0xff]
        %v1627 = vld [vmem:[%s422 + $0x58] sm:$0xff]
        %v1628 = vld [vmem:[%s422 + $0x60] sm:$0xff]
        %v1629 = vld [vmem:[%s422 + $0x68] sm:$0xff]
        %v1630 = vld [vmem:[%s422 + $0x70] sm:$0xff]
        %v1631 = vld [vmem:[%s422 + $0x78] sm:$0xff]
        %v1632 = vld [vmem:[%s422 + $0x80] sm:$0xff]
        %v1633 = vld [vmem:[%s422 + $0x88] sm:$0xff]
        %v1634 = vld [vmem:[%s422 + $0x90] sm:$0xff]
        %v1635 = vld [vmem:[%s422 + $0x98] sm:$0xff]
        %v1636 = vld [vmem:[%s422 + $0xa0] sm:$0xff]
        %v1637 = vld [vmem:[%s422 + $0xa8] sm:$0xff]
        %v1638 = vld [vmem:[%s422 + $0xb0] sm:$0xff]
        %v1639 = vld [vmem:[%s422 + $0xb8] sm:$0xff]
        %v1640 = vld [vmem:[%s422 + $0xc0] sm:$0xff]
        %v1641 = vld [vmem:[%s422 + $0xc8] sm:$0xff]
        %v1642 = vld [vmem:[%s422 + $0xd0] sm:$0xff]
        %v1643 = vld [vmem:[%s422 + $0xd8] sm:$0xff]
        %v1644 = vld [vmem:[%s422 + $0xe0] sm:$0xff]
        %v1645 = vld [vmem:[%s422 + $0xe8] sm:$0xff]
        %v1646 = vld [vmem:[%s422 + $0xf0] sm:$0xff]
        %v1647 = vld [vmem:[%s422 + $0xf8] sm:$0xff]
        %v1648 = vld [vmem:[%s422 + $0x100] sm:$0xff]
        %v1649 = vld [vmem:[%s422 + $0x108] sm:$0xff]
        %v1650 = vld [vmem:[%s422 + $0x110] sm:$0xff]
        %v1651 = vld [vmem:[%s422 + $0x118] sm:$0xff]
        %v1652 = vld [vmem:[%s422 + $0x120] sm:$0xff]
        %v1653 = vld [vmem:[%s422 + $0x128] sm:$0xff]
        %v1654 = vld [vmem:[%s422 + $0x130] sm:$0xff]
        %v1655 = vld [vmem:[%s422 + $0x138] sm:$0xff]
        %v1656 = vld [vmem:[%s422 + $0x140] sm:$0xff]
        %v1657 = vld [vmem:[%s422 + $0x148] sm:$0xff]
        %v1658 = vld [vmem:[%s422 + $0x150] sm:$0xff]
        %v1659 = vld [vmem:[%s422 + $0x158] sm:$0xff]
        %v1660 = vld [vmem:[%s422 + $0x160] sm:$0xff]
        %v1661 = vld [vmem:[%s422 + $0x168] sm:$0xff]
        %v1662 = vld [vmem:[%s422 + $0x170] sm:$0xff]
        %v1663 = vld [vmem:[%s422 + $0x178] sm:$0xff]
        %v1664 = vld [vmem:[%s422 + $0x180] sm:$0xff]
        %v1665 = vld [vmem:[%s422 + $0x188] sm:$0xff]
        %v1666 = vld [vmem:[%s422 + $0x190] sm:$0xff]
        %v1667 = vld [vmem:[%s422 + $0x198] sm:$0xff]
        %v1668 = vld [vmem:[%s422 + $0x1a0] sm:$0xff]
        %v1669 = vld [vmem:[%s422 + $0x1a8] sm:$0xff]
        %v1670 = vld [vmem:[%s422 + $0x1b0] sm:$0xff]
        %v1671 = vld [vmem:[%s422 + $0x1b8] sm:$0xff]
        %v1672 = vld [vmem:[%s422 + $0x1c0] sm:$0xff]
        %v1673 = vld [vmem:[%s422 + $0x1c8] sm:$0xff]
        %v1674 = vld [vmem:[%s422 + $0x1d0] sm:$0xff]
        %v1675 = vld [vmem:[%s422 + $0x1d8] sm:$0xff]
        %v1676 = vld [vmem:[%s422 + $0x1e0] sm:$0xff]
        %v1677 = vld [vmem:[%s422 + $0x1e8] sm:$0xff]
        %v1678 = vld [vmem:[%s422 + $0x1f0] sm:$0xff]
        %v1679 = vld [vmem:[%s422 + $0x1f8] sm:$0xff]
        %v1680 = vlaneseq
        %v1681 = vshrl.u32 %v1680, 7
        %v1682 = vsub.s32 3, %v1681
        %v1683 = vrot.slane %v512, %v1682
        %v1684 = vlaneseq
        %v1685 = vshrl.u32 %v1684, 7
        %v1686 = vsub.s32 3, %v1685
        %v1687 = vrot.slane %v513, %v1686
        %v1688 = vlaneseq
        %v1689 = vshrl.u32 %v1688, 7
        %v1690 = vsub.s32 3, %v1689
        %v1691 = vrot.slane %v514, %v1690
        %v1692 = vlaneseq
        %v1693 = vshrl.u32 %v1692, 7
        %v1694 = vsub.s32 3, %v1693
        %v1695 = vrot.slane %v515, %v1694
        %v1760 = vunpack.c.l.b16 %v1616
        %v1761 = vunpack.c.h.b16 %v1616
        %v1762 = vunpack.c.l.b16 %v1617
        %v1763 = vunpack.c.h.b16 %v1617
        %v1764 = vunpack.c.l.b16 %v1618
        %v1765 = vunpack.c.h.b16 %v1618
        %v1766 = vunpack.c.l.b16 %v1619
        %v1767 = vunpack.c.h.b16 %v1619
        %v1768 = vunpack.c.l.b16 %v1620
        %v1769 = vunpack.c.h.b16 %v1620
        %v1770 = vunpack.c.l.b16 %v1621
        %v1771 = vunpack.c.h.b16 %v1621
        %v1772 = vunpack.c.l.b16 %v1622
        %v1773 = vunpack.c.h.b16 %v1622
        %v1774 = vunpack.c.l.b16 %v1623
        %v1775 = vunpack.c.h.b16 %v1623
        %v1776 = vunpack.c.l.b16 %v1624
        %v1777 = vunpack.c.h.b16 %v1624
        %v1778 = vunpack.c.l.b16 %v1625
        %v1779 = vunpack.c.h.b16 %v1625
        %v1780 = vunpack.c.l.b16 %v1626
        %v1781 = vunpack.c.h.b16 %v1626
        %v1782 = vunpack.c.l.b16 %v1627
        %v1783 = vunpack.c.h.b16 %v1627
        %v1784 = vunpack.c.l.b16 %v1628
        %v1785 = vunpack.c.h.b16 %v1628
        %v1786 = vunpack.c.l.b16 %v1629
        %v1787 = vunpack.c.h.b16 %v1629
        %v1788 = vunpack.c.l.b16 %v1630
        %v1789 = vunpack.c.h.b16 %v1630
        %v1790 = vunpack.c.l.b16 %v1631
        %v1791 = vunpack.c.h.b16 %v1631
        %v1792 = vunpack.c.l.b16 %v1632
        %v1793 = vunpack.c.h.b16 %v1632
        %v1794 = vunpack.c.l.b16 %v1633
        %v1795 = vunpack.c.h.b16 %v1633
        %v1796 = vunpack.c.l.b16 %v1634
        %v1797 = vunpack.c.h.b16 %v1634
        %v1798 = vunpack.c.l.b16 %v1635
        %v1799 = vunpack.c.h.b16 %v1635
        %v1800 = vunpack.c.l.b16 %v1636
        %v1801 = vunpack.c.h.b16 %v1636
        %v1802 = vunpack.c.l.b16 %v1637
        %v1803 = vunpack.c.h.b16 %v1637
        %v1804 = vunpack.c.l.b16 %v1638
        %v1805 = vunpack.c.h.b16 %v1638
        %v1806 = vunpack.c.l.b16 %v1639
        %v1807 = vunpack.c.h.b16 %v1639
        %v1808 = vunpack.c.l.b16 %v1640
        %v1809 = vunpack.c.h.b16 %v1640
        %v1810 = vunpack.c.l.b16 %v1641
        %v1811 = vunpack.c.h.b16 %v1641
        %v1812 = vunpack.c.l.b16 %v1642
        %v1813 = vunpack.c.h.b16 %v1642
        %v1814 = vunpack.c.l.b16 %v1643
        %v1815 = vunpack.c.h.b16 %v1643
        %v1816 = vunpack.c.l.b16 %v1644
        %v1817 = vunpack.c.h.b16 %v1644
        %v1818 = vunpack.c.l.b16 %v1645
        %v1819 = vunpack.c.h.b16 %v1645
        %v1820 = vunpack.c.l.b16 %v1646
        %v1821 = vunpack.c.h.b16 %v1646
        %v1822 = vunpack.c.l.b16 %v1647
        %v1823 = vunpack.c.h.b16 %v1647
        %v1824 = vunpack.c.l.b16 %v1648
        %v1825 = vunpack.c.h.b16 %v1648
        %v1826 = vunpack.c.l.b16 %v1649
        %v1827 = vunpack.c.h.b16 %v1649
        %v1828 = vunpack.c.l.b16 %v1650
        %v1829 = vunpack.c.h.b16 %v1650
        %v1830 = vunpack.c.l.b16 %v1651
        %v1831 = vunpack.c.h.b16 %v1651
        %v1832 = vunpack.c.l.b16 %v1652
        %v1833 = vunpack.c.h.b16 %v1652
        %v1834 = vunpack.c.l.b16 %v1653
        %v1835 = vunpack.c.h.b16 %v1653
        %v1836 = vunpack.c.l.b16 %v1654
        %v1837 = vunpack.c.h.b16 %v1654
        %v1838 = vunpack.c.l.b16 %v1655
        %v1839 = vunpack.c.h.b16 %v1655
        %v1840 = vunpack.c.l.b16 %v1656
        %v1841 = vunpack.c.h.b16 %v1656
        %v1842 = vunpack.c.l.b16 %v1657
        %v1843 = vunpack.c.h.b16 %v1657
        %v1844 = vunpack.c.l.b16 %v1658
        %v1845 = vunpack.c.h.b16 %v1658
        %v1846 = vunpack.c.l.b16 %v1659
        %v1847 = vunpack.c.h.b16 %v1659
        %v1848 = vunpack.c.l.b16 %v1660
        %v1849 = vunpack.c.h.b16 %v1660
        %v1850 = vunpack.c.l.b16 %v1661
        %v1851 = vunpack.c.h.b16 %v1661
        %v1852 = vunpack.c.l.b16 %v1662
        %v1853 = vunpack.c.h.b16 %v1662
        %v1854 = vunpack.c.l.b16 %v1663
        %v1855 = vunpack.c.h.b16 %v1663
        %v1856 = vunpack.c.l.b16 %v1664
        %v1857 = vunpack.c.h.b16 %v1664
        %v1858 = vunpack.c.l.b16 %v1665
        %v1859 = vunpack.c.h.b16 %v1665
        %v1860 = vunpack.c.l.b16 %v1666
        %v1861 = vunpack.c.h.b16 %v1666
        %v1862 = vunpack.c.l.b16 %v1667
        %v1863 = vunpack.c.h.b16 %v1667
        %v1864 = vunpack.c.l.b16 %v1668
        %v1865 = vunpack.c.h.b16 %v1668
        %v1866 = vunpack.c.l.b16 %v1669
        %v1867 = vunpack.c.h.b16 %v1669
        %v1868 = vunpack.c.l.b16 %v1670
        %v1869 = vunpack.c.h.b16 %v1670
        %v1870 = vunpack.c.l.b16 %v1671
        %v1871 = vunpack.c.h.b16 %v1671
        %v1872 = vunpack.c.l.b16 %v1672
        %v1873 = vunpack.c.h.b16 %v1672
        %v1874 = vunpack.c.l.b16 %v1673
        %v1875 = vunpack.c.h.b16 %v1673
        %v1876 = vunpack.c.l.b16 %v1674
        %v1877 = vunpack.c.h.b16 %v1674
        %v1878 = vunpack.c.l.b16 %v1675
        %v1879 = vunpack.c.h.b16 %v1675
        %v1880 = vunpack.c.l.b16 %v1676
        %v1881 = vunpack.c.h.b16 %v1676
        %v1882 = vunpack.c.l.b16 %v1677
        %v1883 = vunpack.c.h.b16 %v1677
        %v1884 = vunpack.c.l.b16 %v1678
        %v1885 = vunpack.c.h.b16 %v1678
        %v1886 = vunpack.c.l.b16 %v1679
        %v1887 = vunpack.c.h.b16 %v1679
        %v1888 = vpack.c.b16 %v1764, %v1760
        %v1889 = vpack.c.b16 %v1765, %v1761
        %v1890 = vpack.c.b16 %v1766, %v1762
        %v1891 = vpack.c.b16 %v1767, %v1763
        %v1892 = vpack.c.b16 %v1772, %v1768
        %v1893 = vpack.c.b16 %v1773, %v1769
        %v1894 = vpack.c.b16 %v1774, %v1770
        %v1895 = vpack.c.b16 %v1775, %v1771
        %v1896 = vpack.c.b16 %v1780, %v1776
        %v1897 = vpack.c.b16 %v1781, %v1777
        %v1898 = vpack.c.b16 %v1782, %v1778
        %v1899 = vpack.c.b16 %v1783, %v1779
        %v1900 = vpack.c.b16 %v1788, %v1784
        %v1901 = vpack.c.b16 %v1789, %v1785
        %v1902 = vpack.c.b16 %v1790, %v1786
        %v1903 = vpack.c.b16 %v1791, %v1787
        %v1904 = vpack.c.b16 %v1796, %v1792
        %v1905 = vpack.c.b16 %v1797, %v1793
        %v1906 = vpack.c.b16 %v1798, %v1794
        %v1907 = vpack.c.b16 %v1799, %v1795
        %v1908 = vpack.c.b16 %v1804, %v1800
        %v1909 = vpack.c.b16 %v1805, %v1801
        %v1910 = vpack.c.b16 %v1806, %v1802
        %v1911 = vpack.c.b16 %v1807, %v1803
        %v1912 = vpack.c.b16 %v1812, %v1808
        %v1913 = vpack.c.b16 %v1813, %v1809
        %v1914 = vpack.c.b16 %v1814, %v1810
        %v1915 = vpack.c.b16 %v1815, %v1811
        %v1916 = vpack.c.b16 %v1820, %v1816
        %v1917 = vpack.c.b16 %v1821, %v1817
        %v1918 = vpack.c.b16 %v1822, %v1818
        %v1919 = vpack.c.b16 %v1823, %v1819
        %v1920 = vpack.c.b16 %v1828, %v1824
        %v1921 = vpack.c.b16 %v1829, %v1825
        %v1922 = vpack.c.b16 %v1830, %v1826
        %v1923 = vpack.c.b16 %v1831, %v1827
        %v1924 = vpack.c.b16 %v1836, %v1832
        %v1925 = vpack.c.b16 %v1837, %v1833
        %v1926 = vpack.c.b16 %v1838, %v1834
        %v1927 = vpack.c.b16 %v1839, %v1835
        %v1928 = vpack.c.b16 %v1844, %v1840
        %v1929 = vpack.c.b16 %v1845, %v1841
        %v1930 = vpack.c.b16 %v1846, %v1842
        %v1931 = vpack.c.b16 %v1847, %v1843
        %v1932 = vpack.c.b16 %v1852, %v1848
        %v1933 = vpack.c.b16 %v1853, %v1849
        %v1934 = vpack.c.b16 %v1854, %v1850
        %v1935 = vpack.c.b16 %v1855, %v1851
        %v1936 = vpack.c.b16 %v1860, %v1856
        %v1937 = vpack.c.b16 %v1861, %v1857
        %v1938 = vpack.c.b16 %v1862, %v1858
        %v1939 = vpack.c.b16 %v1863, %v1859
        %v1940 = vpack.c.b16 %v1868, %v1864
        %v1941 = vpack.c.b16 %v1869, %v1865
        %v1942 = vpack.c.b16 %v1870, %v1866
        %v1943 = vpack.c.b16 %v1871, %v1867
        %v1944 = vpack.c.b16 %v1876, %v1872
        %v1945 = vpack.c.b16 %v1877, %v1873
        %v1946 = vpack.c.b16 %v1878, %v1874
        %v1947 = vpack.c.b16 %v1879, %v1875
        %v1948 = vpack.c.b16 %v1884, %v1880
        %v1949 = vpack.c.b16 %v1885, %v1881
        %v1950 = vpack.c.b16 %v1886, %v1882
        %v1951 = vpack.c.b16 %v1887, %v1883
        %2016 = vmatprep.subr.bf16.mxu0 %v1889
        %2017 = vmatpush1.bf16.msra.mxu0 %v1888
        %2018 = vmatprep.subr.bf16.mxu0 %v1893
        %2019 = vmatpush1.bf16.msra.mxu0 %v1892
        %2020 = vmatprep.subr.bf16.mxu0 %v1897
        %2021 = vmatpush1.bf16.msra.mxu0 %v1896
        %2022 = vmatprep.subr.bf16.mxu0 %v1901
        %2023 = vmatpush1.bf16.msra.mxu0 %v1900
        %2024 = vmatprep.subr.bf16.mxu0 %v1905
        %2025 = vmatpush1.bf16.msra.mxu0 %v1904
        %2026 = vmatprep.subr.bf16.mxu0 %v1909
        %2027 = vmatpush1.bf16.msra.mxu0 %v1908
        %2028 = vmatprep.subr.bf16.mxu0 %v1913
        %2029 = vmatpush1.bf16.msra.mxu0 %v1912
        %2030 = vmatprep.subr.bf16.mxu0 %v1917
        %2031 = vmatpush1.bf16.msra.mxu0 %v1916
        %2032 = vmatprep.subr.bf16.mxu0 %v1921
        %2033 = vmatpush1.bf16.msra.mxu0 %v1920
        %2034 = vmatprep.subr.bf16.mxu0 %v1925
        %2035 = vmatpush1.bf16.msra.mxu0 %v1924
        %2036 = vmatprep.subr.bf16.mxu0 %v1929
        %2037 = vmatpush1.bf16.msra.mxu0 %v1928
        %2038 = vmatprep.subr.bf16.mxu0 %v1933
        %2039 = vmatpush1.bf16.msra.mxu0 %v1932
        %2040 = vmatprep.subr.bf16.mxu0 %v1937
        %2041 = vmatpush1.bf16.msra.mxu0 %v1936
        %2042 = vmatprep.subr.bf16.mxu0 %v1941
        %2043 = vmatpush1.bf16.msra.mxu0 %v1940
        %2044 = vmatprep.subr.bf16.mxu0 %v1945
        %2045 = vmatpush1.bf16.msra.mxu0 %v1944
        %2046 = vmatprep.subr.bf16.mxu0 %v1949
        %2047 = vmatpush1.bf16.msra.mxu0 %v1948
        %2048 = vmatprep.mubr.bf16.mxu0 %v1613
        %2049 = vmatmul.mubr.bf16.gmra.mrb[0].mxu0 %v1612
        %v2050 = vpop.f32.mrb[0].mxu0
        %v2051 = vadd.f32 %v1683, %v2050
        %v2052 = vpop.f32.mrb[0].mxu0
        %v2053 = vadd.f32 %v1687, %v2052
        %v2054 = vpop.f32.mrb[0].mxu0
        %v2055 = vadd.f32 %v1683, %v2054
        %v2056 = vpop.f32.mrb[0].mxu0
        %v2057 = vadd.f32 %v1687, %v2056
        %2058 = vmatprep.mubr.bf16.mxu0 %v1615
        %2059 = vmatmul.mubr.bf16.gmra.mrb[0].mxu0 %v1614
        %v2060 = vpop.f32.mrb[0].mxu0
        %v2061 = vadd.f32 %v1683, %v2060
        %v2062 = vpop.f32.mrb[0].mxu0
        %v2063 = vadd.f32 %v1687, %v2062
        %v2064 = vpop.f32.mrb[0].mxu0
        %v2065 = vadd.f32 %v1683, %v2064
        %v2066 = vpop.f32.mrb[0].mxu0
        %v2067 = vadd.f32 %v1687, %v2066
        %2068 = vdwg.mxu0
        %2069 = vmatprep.subr.bf16.mxu0 %v1891
        %2070 = vmatpush1.bf16.msra.mxu0 %v1890
        %2071 = vmatprep.subr.bf16.mxu0 %v1895
        %2072 = vmatpush1.bf16.msra.mxu0 %v1894
        %2073 = vmatprep.subr.bf16.mxu0 %v1899
        %2074 = vmatpush1.bf16.msra.mxu0 %v1898
        %2075 = vmatprep.subr.bf16.mxu0 %v1903
        %2076 = vmatpush1.bf16.msra.mxu0 %v1902
        %2077 = vmatprep.subr.bf16.mxu0 %v1907
        %2078 = vmatpush1.bf16.msra.mxu0 %v1906
        %2079 = vmatprep.subr.bf16.mxu0 %v1911
        %2080 = vmatpush1.bf16.msra.mxu0 %v1910
        %2081 = vmatprep.subr.bf16.mxu0 %v1915
        %2082 = vmatpush1.bf16.msra.mxu0 %v1914
        %2083 = vmatprep.subr.bf16.mxu0 %v1919
        %2084 = vmatpush1.bf16.msra.mxu0 %v1918
        %2085 = vmatprep.subr.bf16.mxu0 %v1923
        %2086 = vmatpush1.bf16.msra.mxu0 %v1922
        %2087 = vmatprep.subr.bf16.mxu0 %v1927
        %2088 = vmatpush1.bf16.msra.mxu0 %v1926
        %2089 = vmatprep.subr.bf16.mxu0 %v1931
        %2090 = vmatpush1.bf16.msra.mxu0 %v1930
        %2091 = vmatprep.subr.bf16.mxu0 %v1935
        %2092 = vmatpush1.bf16.msra.mxu0 %v1934
        %2093 = vmatprep.subr.bf16.mxu0 %v1939
        %2094 = vmatpush1.bf16.msra.mxu0 %v1938
        %2095 = vmatprep.subr.bf16.mxu0 %v1943
        %2096 = vmatpush1.bf16.msra.mxu0 %v1942
        %2097 = vmatprep.subr.bf16.mxu0 %v1947
        %2098 = vmatpush1.bf16.msra.mxu0 %v1946
        %2099 = vmatprep.subr.bf16.mxu0 %v1951
        %2100 = vmatpush1.bf16.msra.mxu0 %v1950
        %2101 = vmatprep.mubr.bf16.mxu0 %v1613
        %2102 = vmatmul.mubr.bf16.gmra.mrb[0].mxu0 %v1612
        %v2103 = vpop.f32.mrb[0].mxu0
        %v2104 = vadd.f32 %v1691, %v2103
        %v2105 = vpop.f32.mrb[0].mxu0
        %v2106 = vadd.f32 %v1695, %v2105
        %v2107 = vpop.f32.mrb[0].mxu0
        %v2108 = vadd.f32 %v1691, %v2107
        %v2109 = vpop.f32.mrb[0].mxu0
        %v2110 = vadd.f32 %v1695, %v2109
        %2111 = vmatprep.mubr.bf16.mxu0 %v1615
        %2112 = vmatmul.mubr.bf16.gmra.mrb[0].mxu0 %v1614
        %v2113 = vpop.f32.mrb[0].mxu0
        %v2114 = vadd.f32 %v1691, %v2113
        %v2115 = vpop.f32.mrb[0].mxu0
        %v2116 = vadd.f32 %v1695, %v2115
        %v2117 = vpop.f32.mrb[0].mxu0
        %v2118 = vadd.f32 %v1691, %v2117
        %v2119 = vpop.f32.mrb[0].mxu0
        %v2120 = vadd.f32 %v1695, %v2119
        %2121 = vdwg.mxu0
        %v2122 = vmax.f32 %v2051, 0.0
        %v2123 = vmax.f32 %v2053, 0.0
        %v2124 = vmax.f32 %v2104, 0.0
        %v2125 = vmax.f32 %v2106, 0.0
        %v2126 = vmax.f32 %v2055, 0.0
        %v2127 = vmax.f32 %v2057, 0.0
        %v2128 = vmax.f32 %v2108, 0.0
        %v2129 = vmax.f32 %v2110, 0.0
        %v2130 = vmax.f32 %v2061, 0.0
        %v2131 = vmax.f32 %v2063, 0.0
        %v2132 = vmax.f32 %v2114, 0.0
        %v2133 = vmax.f32 %v2116, 0.0
        %v2134 = vmax.f32 %v2065, 0.0
        %v2135 = vmax.f32 %v2067, 0.0
        %v2136 = vmax.f32 %v2118, 0.0
        %v2137 = vmax.f32 %v2120, 0.0
        %v2138 = vpack.c.bf16 %v2126, %v2122
        %v2139 = vpack.c.bf16 %v2127, %v2123
        %v2140 = vpack.c.bf16 %v2128, %v2124
        %v2141 = vpack.c.bf16 %v2129, %v2125
        %v2142 = vpack.c.bf16 %v2134, %v2130
        %v2143 = vpack.c.bf16 %v2135, %v2131
        %v2144 = vpack.c.bf16 %v2136, %v2132
        %v2145 = vpack.c.bf16 %v2137, %v2133
        %v2146 = vld [vmem:[%s431] sm:$0xff]
        %v2147 = vld [vmem:[%s431 + $0x8] sm:$0xff]
        %v2148 = vld [vmem:[%s431 + $0x10] sm:$0xff]
        %v2149 = vld [vmem:[%s431 + $0x18] sm:$0xff]
        %v2150 = vld [vmem:[%s431 + $0x20] sm:$0xff]
        %v2151 = vld [vmem:[%s431 + $0x28] sm:$0xff]
        %v2152 = vld [vmem:[%s431 + $0x30] sm:$0xff]
        %v2153 = vld [vmem:[%s431 + $0x38] sm:$0xff]
        %v2154 = vld [vmem:[%s431 + $0x40] sm:$0xff]
        %v2155 = vld [vmem:[%s431 + $0x48] sm:$0xff]
        %v2156 = vld [vmem:[%s431 + $0x50] sm:$0xff]
        %v2157 = vld [vmem:[%s431 + $0x58] sm:$0xff]
        %v2158 = vld [vmem:[%s431 + $0x60] sm:$0xff]
        %v2159 = vld [vmem:[%s431 + $0x68] sm:$0xff]
        %v2160 = vld [vmem:[%s431 + $0x70] sm:$0xff]
        %v2161 = vld [vmem:[%s431 + $0x78] sm:$0xff]
        %v2162 = vld [vmem:[%s431 + $0x80] sm:$0xff]
        %v2163 = vld [vmem:[%s431 + $0x88] sm:$0xff]
        %v2164 = vld [vmem:[%s431 + $0x90] sm:$0xff]
        %v2165 = vld [vmem:[%s431 + $0x98] sm:$0xff]
        %v2166 = vld [vmem:[%s431 + $0xa0] sm:$0xff]
        %v2167 = vld [vmem:[%s431 + $0xa8] sm:$0xff]
        %v2168 = vld [vmem:[%s431 + $0xb0] sm:$0xff]
        %v2169 = vld [vmem:[%s431 + $0xb8] sm:$0xff]
        %v2170 = vld [vmem:[%s431 + $0xc0] sm:$0xff]
        %v2171 = vld [vmem:[%s431 + $0xc8] sm:$0xff]
        %v2172 = vld [vmem:[%s431 + $0xd0] sm:$0xff]
        %v2173 = vld [vmem:[%s431 + $0xd8] sm:$0xff]
        %v2174 = vld [vmem:[%s431 + $0xe0] sm:$0xff]
        %v2175 = vld [vmem:[%s431 + $0xe8] sm:$0xff]
        %v2176 = vld [vmem:[%s431 + $0xf0] sm:$0xff]
        %v2177 = vld [vmem:[%s431 + $0xf8] sm:$0xff]
        %v2178 = vld [vmem:[%s431 + $0x100] sm:$0xff]
        %v2179 = vld [vmem:[%s431 + $0x108] sm:$0xff]
        %v2180 = vld [vmem:[%s431 + $0x110] sm:$0xff]
        %v2181 = vld [vmem:[%s431 + $0x118] sm:$0xff]
        %v2182 = vld [vmem:[%s431 + $0x120] sm:$0xff]
        %v2183 = vld [vmem:[%s431 + $0x128] sm:$0xff]
        %v2184 = vld [vmem:[%s431 + $0x130] sm:$0xff]
        %v2185 = vld [vmem:[%s431 + $0x138] sm:$0xff]
        %v2186 = vld [vmem:[%s431 + $0x140] sm:$0xff]
        %v2187 = vld [vmem:[%s431 + $0x148] sm:$0xff]
        %v2188 = vld [vmem:[%s431 + $0x150] sm:$0xff]
        %v2189 = vld [vmem:[%s431 + $0x158] sm:$0xff]
        %v2190 = vld [vmem:[%s431 + $0x160] sm:$0xff]
        %v2191 = vld [vmem:[%s431 + $0x168] sm:$0xff]
        %v2192 = vld [vmem:[%s431 + $0x170] sm:$0xff]
        %v2193 = vld [vmem:[%s431 + $0x178] sm:$0xff]
        %v2194 = vld [vmem:[%s431 + $0x180] sm:$0xff]
        %v2195 = vld [vmem:[%s431 + $0x188] sm:$0xff]
        %v2196 = vld [vmem:[%s431 + $0x190] sm:$0xff]
        %v2197 = vld [vmem:[%s431 + $0x198] sm:$0xff]
        %v2198 = vld [vmem:[%s431 + $0x1a0] sm:$0xff]
        %v2199 = vld [vmem:[%s431 + $0x1a8] sm:$0xff]
        %v2200 = vld [vmem:[%s431 + $0x1b0] sm:$0xff]
        %v2201 = vld [vmem:[%s431 + $0x1b8] sm:$0xff]
        %v2202 = vld [vmem:[%s431 + $0x1c0] sm:$0xff]
        %v2203 = vld [vmem:[%s431 + $0x1c8] sm:$0xff]
        %v2204 = vld [vmem:[%s431 + $0x1d0] sm:$0xff]
        %v2205 = vld [vmem:[%s431 + $0x1d8] sm:$0xff]
        %v2206 = vld [vmem:[%s431 + $0x1e0] sm:$0xff]
        %v2207 = vld [vmem:[%s431 + $0x1e8] sm:$0xff]
        %v2208 = vld [vmem:[%s431 + $0x1f0] sm:$0xff]
        %v2209 = vld [vmem:[%s431 + $0x1f8] sm:$0xff]
        %v2210 = vlaneseq
        %v2211 = vshrl.u32 %v2210, 7
        %v2212 = vsub.s32 4, %v2211
        %v2213 = vrot.slane %v512, %v2212
        %v2214 = vlaneseq
        %v2215 = vshrl.u32 %v2214, 7
        %v2216 = vsub.s32 4, %v2215
        %v2217 = vrot.slane %v513, %v2216
        %v2282 = vunpack.c.l.b16 %v2146
        %v2283 = vunpack.c.h.b16 %v2146
        %v2284 = vunpack.c.l.b16 %v2147
        %v2285 = vunpack.c.h.b16 %v2147
        %v2286 = vunpack.c.l.b16 %v2148
        %v2287 = vunpack.c.h.b16 %v2148
        %v2288 = vunpack.c.l.b16 %v2149
        %v2289 = vunpack.c.h.b16 %v2149
        %v2290 = vunpack.c.l.b16 %v2150
        %v2291 = vunpack.c.h.b16 %v2150
        %v2292 = vunpack.c.l.b16 %v2151
        %v2293 = vunpack.c.h.b16 %v2151
        %v2294 = vunpack.c.l.b16 %v2152
        %v2295 = vunpack.c.h.b16 %v2152
        %v2296 = vunpack.c.l.b16 %v2153
        %v2297 = vunpack.c.h.b16 %v2153
        %v2298 = vunpack.c.l.b16 %v2154
        %v2299 = vunpack.c.h.b16 %v2154
        %v2300 = vunpack.c.l.b16 %v2155
        %v2301 = vunpack.c.h.b16 %v2155
        %v2302 = vunpack.c.l.b16 %v2156
        %v2303 = vunpack.c.h.b16 %v2156
        %v2304 = vunpack.c.l.b16 %v2157
        %v2305 = vunpack.c.h.b16 %v2157
        %v2306 = vunpack.c.l.b16 %v2158
        %v2307 = vunpack.c.h.b16 %v2158
        %v2308 = vunpack.c.l.b16 %v2159
        %v2309 = vunpack.c.h.b16 %v2159
        %v2310 = vunpack.c.l.b16 %v2160
        %v2311 = vunpack.c.h.b16 %v2160
        %v2312 = vunpack.c.l.b16 %v2161
        %v2313 = vunpack.c.h.b16 %v2161
        %v2314 = vunpack.c.l.b16 %v2162
        %v2315 = vunpack.c.h.b16 %v2162
        %v2316 = vunpack.c.l.b16 %v2163
        %v2317 = vunpack.c.h.b16 %v2163
        %v2318 = vunpack.c.l.b16 %v2164
        %v2319 = vunpack.c.h.b16 %v2164
        %v2320 = vunpack.c.l.b16 %v2165
        %v2321 = vunpack.c.h.b16 %v2165
        %v2322 = vunpack.c.l.b16 %v2166
        %v2323 = vunpack.c.h.b16 %v2166
        %v2324 = vunpack.c.l.b16 %v2167
        %v2325 = vunpack.c.h.b16 %v2167
        %v2326 = vunpack.c.l.b16 %v2168
        %v2327 = vunpack.c.h.b16 %v2168
        %v2328 = vunpack.c.l.b16 %v2169
        %v2329 = vunpack.c.h.b16 %v2169
        %v2330 = vunpack.c.l.b16 %v2170
        %v2331 = vunpack.c.h.b16 %v2170
        %v2332 = vunpack.c.l.b16 %v2171
        %v2333 = vunpack.c.h.b16 %v2171
        %v2334 = vunpack.c.l.b16 %v2172
        %v2335 = vunpack.c.h.b16 %v2172
        %v2336 = vunpack.c.l.b16 %v2173
        %v2337 = vunpack.c.h.b16 %v2173
        %v2338 = vunpack.c.l.b16 %v2174
        %v2339 = vunpack.c.h.b16 %v2174
        %v2340 = vunpack.c.l.b16 %v2175
        %v2341 = vunpack.c.h.b16 %v2175
        %v2342 = vunpack.c.l.b16 %v2176
        %v2343 = vunpack.c.h.b16 %v2176
        %v2344 = vunpack.c.l.b16 %v2177
        %v2345 = vunpack.c.h.b16 %v2177
        %v2346 = vunpack.c.l.b16 %v2178
        %v2347 = vunpack.c.h.b16 %v2178
        %v2348 = vunpack.c.l.b16 %v2179
        %v2349 = vunpack.c.h.b16 %v2179
        %v2350 = vunpack.c.l.b16 %v2180
        %v2351 = vunpack.c.h.b16 %v2180
        %v2352 = vunpack.c.l.b16 %v2181
        %v2353 = vunpack.c.h.b16 %v2181
        %v2354 = vunpack.c.l.b16 %v2182
        %v2355 = vunpack.c.h.b16 %v2182
        %v2356 = vunpack.c.l.b16 %v2183
        %v2357 = vunpack.c.h.b16 %v2183
        %v2358 = vunpack.c.l.b16 %v2184
        %v2359 = vunpack.c.h.b16 %v2184
        %v2360 = vunpack.c.l.b16 %v2185
        %v2361 = vunpack.c.h.b16 %v2185
        %v2362 = vunpack.c.l.b16 %v2186
        %v2363 = vunpack.c.h.b16 %v2186
        %v2364 = vunpack.c.l.b16 %v2187
        %v2365 = vunpack.c.h.b16 %v2187
        %v2366 = vunpack.c.l.b16 %v2188
        %v2367 = vunpack.c.h.b16 %v2188
        %v2368 = vunpack.c.l.b16 %v2189
        %v2369 = vunpack.c.h.b16 %v2189
        %v2370 = vunpack.c.l.b16 %v2190
        %v2371 = vunpack.c.h.b16 %v2190
        %v2372 = vunpack.c.l.b16 %v2191
        %v2373 = vunpack.c.h.b16 %v2191
        %v2374 = vunpack.c.l.b16 %v2192
        %v2375 = vunpack.c.h.b16 %v2192
        %v2376 = vunpack.c.l.b16 %v2193
        %v2377 = vunpack.c.h.b16 %v2193
        %v2378 = vunpack.c.l.b16 %v2194
        %v2379 = vunpack.c.h.b16 %v2194
        %v2380 = vunpack.c.l.b16 %v2195
        %v2381 = vunpack.c.h.b16 %v2195
        %v2382 = vunpack.c.l.b16 %v2196
        %v2383 = vunpack.c.h.b16 %v2196
        %v2384 = vunpack.c.l.b16 %v2197
        %v2385 = vunpack.c.h.b16 %v2197
        %v2386 = vunpack.c.l.b16 %v2198
        %v2387 = vunpack.c.h.b16 %v2198
        %v2388 = vunpack.c.l.b16 %v2199
        %v2389 = vunpack.c.h.b16 %v2199
        %v2390 = vunpack.c.l.b16 %v2200
        %v2391 = vunpack.c.h.b16 %v2200
        %v2392 = vunpack.c.l.b16 %v2201
        %v2393 = vunpack.c.h.b16 %v2201
        %v2394 = vunpack.c.l.b16 %v2202
        %v2395 = vunpack.c.h.b16 %v2202
        %v2396 = vunpack.c.l.b16 %v2203
        %v2397 = vunpack.c.h.b16 %v2203
        %v2398 = vunpack.c.l.b16 %v2204
        %v2399 = vunpack.c.h.b16 %v2204
        %v2400 = vunpack.c.l.b16 %v2205
        %v2401 = vunpack.c.h.b16 %v2205
        %v2402 = vunpack.c.l.b16 %v2206
        %v2403 = vunpack.c.h.b16 %v2206
        %v2404 = vunpack.c.l.b16 %v2207
        %v2405 = vunpack.c.h.b16 %v2207
        %v2406 = vunpack.c.l.b16 %v2208
        %v2407 = vunpack.c.h.b16 %v2208
        %v2408 = vunpack.c.l.b16 %v2209
        %v2409 = vunpack.c.h.b16 %v2209
        %v2410 = vpack.c.b16 %v2284, %v2282
        %v2411 = vpack.c.b16 %v2285, %v2283
        %v2412 = vpack.c.b16 %v2288, %v2286
        %v2413 = vpack.c.b16 %v2289, %v2287
        %v2414 = vpack.c.b16 %v2292, %v2290
        %v2415 = vpack.c.b16 %v2293, %v2291
        %v2416 = vpack.c.b16 %v2296, %v2294
        %v2417 = vpack.c.b16 %v2297, %v2295
        %v2418 = vpack.c.b16 %v2300, %v2298
        %v2419 = vpack.c.b16 %v2301, %v2299
        %v2420 = vpack.c.b16 %v2304, %v2302
        %v2421 = vpack.c.b16 %v2305, %v2303
        %v2422 = vpack.c.b16 %v2308, %v2306
        %v2423 = vpack.c.b16 %v2309, %v2307
        %v2424 = vpack.c.b16 %v2312, %v2310
        %v2425 = vpack.c.b16 %v2313, %v2311
        %v2426 = vpack.c.b16 %v2316, %v2314
        %v2427 = vpack.c.b16 %v2317, %v2315
        %v2428 = vpack.c.b16 %v2320, %v2318
        %v2429 = vpack.c.b16 %v2321, %v2319
        %v2430 = vpack.c.b16 %v2324, %v2322
        %v2431 = vpack.c.b16 %v2325, %v2323
        %v2432 = vpack.c.b16 %v2328, %v2326
        %v2433 = vpack.c.b16 %v2329, %v2327
        %v2434 = vpack.c.b16 %v2332, %v2330
        %v2435 = vpack.c.b16 %v2333, %v2331
        %v2436 = vpack.c.b16 %v2336, %v2334
        %v2437 = vpack.c.b16 %v2337, %v2335
        %v2438 = vpack.c.b16 %v2340, %v2338
        %v2439 = vpack.c.b16 %v2341, %v2339
        %v2440 = vpack.c.b16 %v2344, %v2342
        %v2441 = vpack.c.b16 %v2345, %v2343
        %v2442 = vpack.c.b16 %v2348, %v2346
        %v2443 = vpack.c.b16 %v2349, %v2347
        %v2444 = vpack.c.b16 %v2352, %v2350
        %v2445 = vpack.c.b16 %v2353, %v2351
        %v2446 = vpack.c.b16 %v2356, %v2354
        %v2447 = vpack.c.b16 %v2357, %v2355
        %v2448 = vpack.c.b16 %v2360, %v2358
        %v2449 = vpack.c.b16 %v2361, %v2359
        %v2450 = vpack.c.b16 %v2364, %v2362
        %v2451 = vpack.c.b16 %v2365, %v2363
        %v2452 = vpack.c.b16 %v2368, %v2366
        %v2453 = vpack.c.b16 %v2369, %v2367
        %v2454 = vpack.c.b16 %v2372, %v2370
        %v2455 = vpack.c.b16 %v2373, %v2371
        %v2456 = vpack.c.b16 %v2376, %v2374
        %v2457 = vpack.c.b16 %v2377, %v2375
        %v2458 = vpack.c.b16 %v2380, %v2378
        %v2459 = vpack.c.b16 %v2381, %v2379
        %v2460 = vpack.c.b16 %v2384, %v2382
        %v2461 = vpack.c.b16 %v2385, %v2383
        %v2462 = vpack.c.b16 %v2388, %v2386
        %v2463 = vpack.c.b16 %v2389, %v2387
        %v2464 = vpack.c.b16 %v2392, %v2390
        %v2465 = vpack.c.b16 %v2393, %v2391
        %v2466 = vpack.c.b16 %v2396, %v2394
        %v2467 = vpack.c.b16 %v2397, %v2395
        %v2468 = vpack.c.b16 %v2400, %v2398
        %v2469 = vpack.c.b16 %v2401, %v2399
        %v2470 = vpack.c.b16 %v2404, %v2402
        %v2471 = vpack.c.b16 %v2405, %v2403
        %v2472 = vpack.c.b16 %v2408, %v2406
        %v2473 = vpack.c.b16 %v2409, %v2407
        %2538 = vmatprep.subr.bf16.mxu0 %v2411
        %2539 = vmatpush1.bf16.msra.mxu0 %v2410
        %2540 = vmatprep.subr.bf16.mxu0 %v2413
        %2541 = vmatpush1.bf16.msra.mxu0 %v2412
        %2542 = vmatprep.subr.bf16.mxu0 %v2415
        %2543 = vmatpush1.bf16.msra.mxu0 %v2414
        %2544 = vmatprep.subr.bf16.mxu0 %v2417
        %2545 = vmatpush1.bf16.msra.mxu0 %v2416
        %2546 = vmatprep.subr.bf16.mxu0 %v2419
        %2547 = vmatpush1.bf16.msra.mxu0 %v2418
        %2548 = vmatprep.subr.bf16.mxu0 %v2421
        %2549 = vmatpush1.bf16.msra.mxu0 %v2420
        %2550 = vmatprep.subr.bf16.mxu0 %v2423
        %2551 = vmatpush1.bf16.msra.mxu0 %v2422
        %2552 = vmatprep.subr.bf16.mxu0 %v2425
        %2553 = vmatpush1.bf16.msra.mxu0 %v2424
        %2554 = vmatprep.subr.bf16.mxu0 %v2427
        %2555 = vmatpush1.bf16.msra.mxu0 %v2426
        %2556 = vmatprep.subr.bf16.mxu0 %v2429
        %2557 = vmatpush1.bf16.msra.mxu0 %v2428
        %2558 = vmatprep.subr.bf16.mxu0 %v2431
        %2559 = vmatpush1.bf16.msra.mxu0 %v2430
        %2560 = vmatprep.subr.bf16.mxu0 %v2433
        %2561 = vmatpush1.bf16.msra.mxu0 %v2432
        %2562 = vmatprep.subr.bf16.mxu0 %v2435
        %2563 = vmatpush1.bf16.msra.mxu0 %v2434
        %2564 = vmatprep.subr.bf16.mxu0 %v2437
        %2565 = vmatpush1.bf16.msra.mxu0 %v2436
        %2566 = vmatprep.subr.bf16.mxu0 %v2439
        %2567 = vmatpush1.bf16.msra.mxu0 %v2438
        %2568 = vmatprep.subr.bf16.mxu0 %v2441
        %2569 = vmatpush1.bf16.msra.mxu0 %v2440
        %2570 = vmatprep.mubr.bf16.mxu0 %v2139
        %2571 = vmatmul.mubr.bf16.gmra.mrb[0].mxu0 %v2138
        %v2572 = vpop.f32.mrb[0].mxu0
        %v2573 = vadd.f32 %v2213, %v2572
        %v2574 = vpop.f32.mrb[0].mxu0
        %v2575 = vadd.f32 %v2217, %v2574
        %v2576 = vpop.f32.mrb[0].mxu0
        %v2577 = vadd.f32 %v2213, %v2576
        %v2578 = vpop.f32.mrb[0].mxu0
        %v2579 = vadd.f32 %v2217, %v2578
        %2580 = vmatprep.mubr.bf16.mxu0 %v2143
        %2581 = vmatmul.mubr.bf16.gmra.mrb[0].mxu0 %v2142
        %v2582 = vpop.f32.mrb[0].mxu0
        %v2583 = vadd.f32 %v2213, %v2582
        %v2584 = vpop.f32.mrb[0].mxu0
        %v2585 = vadd.f32 %v2217, %v2584
        %v2586 = vpop.f32.mrb[0].mxu0
        %v2587 = vadd.f32 %v2213, %v2586
        %v2588 = vpop.f32.mrb[0].mxu0
        %v2589 = vadd.f32 %v2217, %v2588
        %2590 = vdwg.mxu0
        %2591 = vmatprep.subr.bf16.mxu0 %v2443
        %2592 = vmatpush1.bf16.msra.mxu0 %v2442
        %2593 = vmatprep.subr.bf16.mxu0 %v2445
        %2594 = vmatpush1.bf16.msra.mxu0 %v2444
        %2595 = vmatprep.subr.bf16.mxu0 %v2447
        %2596 = vmatpush1.bf16.msra.mxu0 %v2446
        %2597 = vmatprep.subr.bf16.mxu0 %v2449
        %2598 = vmatpush1.bf16.msra.mxu0 %v2448
        %2599 = vmatprep.subr.bf16.mxu0 %v2451
        %2600 = vmatpush1.bf16.msra.mxu0 %v2450
        %2601 = vmatprep.subr.bf16.mxu0 %v2453
        %2602 = vmatpush1.bf16.msra.mxu0 %v2452
        %2603 = vmatprep.subr.bf16.mxu0 %v2455
        %2604 = vmatpush1.bf16.msra.mxu0 %v2454
        %2605 = vmatprep.subr.bf16.mxu0 %v2457
        %2606 = vmatpush1.bf16.msra.mxu0 %v2456
        %2607 = vmatprep.subr.bf16.mxu0 %v2459
        %2608 = vmatpush1.bf16.msra.mxu0 %v2458
        %2609 = vmatprep.subr.bf16.mxu0 %v2461
        %2610 = vmatpush1.bf16.msra.mxu0 %v2460
        %2611 = vmatprep.subr.bf16.mxu0 %v2463
        %2612 = vmatpush1.bf16.msra.mxu0 %v2462
        %2613 = vmatprep.subr.bf16.mxu0 %v2465
        %2614 = vmatpush1.bf16.msra.mxu0 %v2464
        %2615 = vmatprep.subr.bf16.mxu0 %v2467
        %2616 = vmatpush1.bf16.msra.mxu0 %v2466
        %2617 = vmatprep.subr.bf16.mxu0 %v2469
        %2618 = vmatpush1.bf16.msra.mxu0 %v2468
        %2619 = vmatprep.subr.bf16.mxu0 %v2471
        %2620 = vmatpush1.bf16.msra.mxu0 %v2470
        %2621 = vmatprep.subr.bf16.mxu0 %v2473
        %2622 = vmatpush1.bf16.msra.mxu0 %v2472
        %2623 = vmatprep.mubr.bf16.mxu0 %v2141
        %2624 = vmatmul.mubr.bf16.gmra.mrb[0].mxu0 %v2140
        %v2625 = vpop.f32.mrb[0].mxu0
        %v2626 = vadd.f32 %v2573, %v2625
        %v2627 = vpop.f32.mrb[0].mxu0
        %v2628 = vadd.f32 %v2575, %v2627
        %v2629 = vpop.f32.mrb[0].mxu0
        %v2630 = vadd.f32 %v2577, %v2629
        %v2631 = vpop.f32.mrb[0].mxu0
        %v2632 = vadd.f32 %v2579, %v2631
        %2633 = vmatprep.mubr.bf16.mxu0 %v2145
        %2634 = vmatmul.mubr.bf16.gmra.mrb[0].mxu0 %v2144
        %v2635 = vpop.f32.mrb[0].mxu0
        %v2636 = vadd.f32 %v2583, %v2635
        %v2637 = vpop.f32.mrb[0].mxu0
        %v2638 = vadd.f32 %v2585, %v2637
        %v2639 = vpop.f32.mrb[0].mxu0
        %v2640 = vadd.f32 %v2587, %v2639
        %v2641 = vpop.f32.mrb[0].mxu0
        %v2642 = vadd.f32 %v2589, %v2641
        %2643 = vdwg.mxu0
        %v2644 = vadd.f32 %v1604, %v2626
        %v2645 = vadd.f32 %v1605, %v2628
        %v2646 = vadd.f32 %v1606, %v2630
        %v2647 = vadd.f32 %v1607, %v2632
        %v2648 = vadd.f32 %v1608, %v2636
        %v2649 = vadd.f32 %v1609, %v2638
        %v2650 = vadd.f32 %v1610, %v2640
        %v2651 = vadd.f32 %v1611, %v2642
        %v2652 = vadd.f32 %v2644, %v2645
        %2653 = vadd.xlane.f32.xlu0 %v2652
        %v2654 = vpop.xlane.xlu0 %2653
        %v2655 = vadd.f32 %v2646, %v2647
        %2656 = vadd.xlane.f32.xlu0 %v2655
        %v2657 = vpop.xlane.xlu0 %2656
        %v2658 = vadd.f32 %v2648, %v2649
        %2659 = vadd.xlane.f32.xlu0 %v2658
        %v2660 = vpop.xlane.xlu0 %2659
        %v2661 = vadd.f32 %v2650, %v2651
        %2662 = vadd.xlane.f32.xlu0 %v2661
        %v2663 = vpop.xlane.xlu0 %2662
        %v2664 = vmul.f32 %v2654, %v1527
        %v2665 = vmul.f32 %v2657, %v1527
        %v2666 = vmul.f32 %v2660, %v1527
        %v2667 = vmul.f32 %v2663, %v1527
        %v2668 = vsub.f32 %v2644, %v2664
        %v2669 = vsub.f32 %v2645, %v2664
        %v2670 = vsub.f32 %v2646, %v2665
        %v2671 = vsub.f32 %v2647, %v2665
        %v2672 = vsub.f32 %v2648, %v2666
        %v2673 = vsub.f32 %v2649, %v2666
        %v2674 = vsub.f32 %v2650, %v2667
        %v2675 = vsub.f32 %v2651, %v2667
        %v2676 = vmul.f32 %v2668, %v2668
        %v2677 = vmul.f32 %v2669, %v2669
        %v2678 = vmul.f32 %v2670, %v2670
        %v2679 = vmul.f32 %v2671, %v2671
        %v2680 = vmul.f32 %v2672, %v2672
        %v2681 = vmul.f32 %v2673, %v2673
        %v2682 = vmul.f32 %v2674, %v2674
        %v2683 = vmul.f32 %v2675, %v2675
        %v2684 = vadd.f32 %v2676, %v2677
        %2685 = vadd.xlane.f32.xlu0 %v2684
        %v2686 = vpop.xlane.xlu0 %2685
        %v2687 = vadd.f32 %v2678, %v2679
        %2688 = vadd.xlane.f32.xlu0 %v2687
        %v2689 = vpop.xlane.xlu0 %2688
        %v2690 = vadd.f32 %v2680, %v2681
        %2691 = vadd.xlane.f32.xlu0 %v2690
        %v2692 = vpop.xlane.xlu0 %2691
        %v2693 = vadd.f32 %v2682, %v2683
        %2694 = vadd.xlane.f32.xlu0 %v2693
        %v2695 = vpop.xlane.xlu0 %2694
        %v2696 = vmul.f32 %v2686, %v1527
        %v2697 = vmul.f32 %v2689, %v1527
        %v2698 = vmul.f32 %v2692, %v1527
        %v2699 = vmul.f32 %v2695, %v1527
        %v2700 = vadd.f32 %v2696, 1e-05
        %v2701 = vadd.f32 %v2697, 1e-05
        %v2702 = vadd.f32 %v2698, 1e-05
        %v2703 = vadd.f32 %v2699, 1e-05
        %v2704 = vrsqrt.pop %v2700
        %v2705 = vrsqrt.pop %v2701
        %v2706 = vrsqrt.pop %v2702
        %v2707 = vrsqrt.pop %v2703
        %v2708 = vmul.f32 %v2668, %v2704
        %v2709 = vmul.f32 %v2669, %v2704
        %v2710 = vmul.f32 %v2670, %v2705
        %v2711 = vmul.f32 %v2671, %v2705
        %v2712 = vmul.f32 %v2672, %v2706
        %v2713 = vmul.f32 %v2673, %v2706
        %v2714 = vmul.f32 %v2674, %v2707
        %v2715 = vmul.f32 %v2675, %v2707
        %v2716 = vlaneseq
        %v2717 = vshrl.u32 %v2716, 7
        %v2718 = vsub.s32 5, %v2717
        %v2719 = vrot.slane %v512, %v2718
        %v2720 = vlaneseq
        %v2721 = vshrl.u32 %v2720, 7
        %v2722 = vsub.s32 5, %v2721
        %v2723 = vrot.slane %v513, %v2722
        %v2724 = vmul.f32 %v2708, %v2719
        %v2725 = vmul.f32 %v2709, %v2723
        %v2726 = vmul.f32 %v2710, %v2719
        %v2727 = vmul.f32 %v2711, %v2723
        %v2728 = vmul.f32 %v2712, %v2719
        %v2729 = vmul.f32 %v2713, %v2723
        %v2730 = vmul.f32 %v2714, %v2719
        %v2731 = vmul.f32 %v2715, %v2723
        %v2732 = vlaneseq
        %v2733 = vshrl.u32 %v2732, 7
        %v2734 = vsub.s32 6, %v2733
        %v2735 = vrot.slane %v512, %v2734
        %v2736 = vlaneseq
        %v2737 = vshrl.u32 %v2736, 7
        %v2738 = vsub.s32 6, %v2737
        %v2739 = vrot.slane %v513, %v2738
        %v2740 = vadd.f32 %v2724, %v2735
        %v2741 = vadd.f32 %v2725, %v2739
        %v2742 = vadd.f32 %v2726, %v2735
        %v2743 = vadd.f32 %v2727, %v2739
        %v2744 = vadd.f32 %v2728, %v2735
        %v2745 = vadd.f32 %v2729, %v2739
        %v2746 = vadd.f32 %v2730, %v2735
        %v2747 = vadd.f32 %v2731, %v2739
        %2748 = vst [vmem:[#allocation14] sm:$0xff] %v2740
        %2749 = vst [vmem:[#allocation14 + $0x8] sm:$0xff] %v2741
        %2750 = vst [vmem:[#allocation14 + $0x10] sm:$0xff] %v2742
        %2751 = vst [vmem:[#allocation14 + $0x18] sm:$0xff] %v2743
        %2752 = vst [vmem:[#allocation14 + $0x20] sm:$0xff] %v2744
        %2753 = vst [vmem:[#allocation14 + $0x28] sm:$0xff] %v2745
        %2754 = vst [vmem:[#allocation14 + $0x30] sm:$0xff] %v2746
        %2755 = vst [vmem:[#allocation14 + $0x38] sm:$0xff] %v2747
        %s2756 = sand.u32 %s228, 1
        %s2757 = scalar_lea.sflag [#allocation16], %s2756
        %s2758 = sand.u32 %s228, 1
        %s2759 = smul.addr %s2758, 32
        %s2760 = scalar_lea.vmem [#allocation15], %s2759
        // Predicated region
        $region81: #{tpu_custom_call.1} parent=47 // pred_check
          %p2761 = pneg %p212
        $region82: #{tpu_custom_call.1} parent=47 // pred_check_branch
          %2763 = sbr.rel (%p2761) target = $region84
        $region83: #{tpu_custom_call.1} parent=47 // pred_region
          %s2765 = ssub.s32 1024, 1024
          %2766 = vsyncadd [#allocation4], %s2765
          %s2767 = sshll.u32 [#allocation14], 4
          %s2768 = int_to_ptr.vmem [resolvable:$true] %s2767
          %2773 = dma.vmem_to_hbm [thread:$0]  %s2768, 1024, %s7, [#allocation4], 256, 256, 16
        $region84: #{tpu_custom_call.1} parent=47 // pred_fallthru
          _
        // Predicated region
        $region85: #{tpu_custom_call.1} parent=47 // pred_check
          %p2774 = pneg %p238
        $region86: #{tpu_custom_call.1} parent=47 // pred_check_branch
          %2776 = sbr.rel (%p2774) target = $region88
        $region87: #{tpu_custom_call.1} parent=47 // pred_region
          %s2778 = ssub.s32 512, 512
          %2779 = vsyncadd %s2757, %s2778
          %s2780 = smul.addr %s32, 4
          %s2781 = smul.addr %s2780, 128
          %s2782 = scalar_lea.hbm %s8, %s2781
          %s2783 = sshll.u32 %s2760, 4
          %s2784 = int_to_ptr.vmem [resolvable:$true] %s2783
          %2789 = dma.vmem_to_hbm [thread:$0]  %s2784, 512, %s2782, %s2757, 128, 128, 8
        $region88: #{tpu_custom_call.1} parent=47 // pred_fallthru
          _
        // Predicated region
        $region89: #{tpu_custom_call.1} parent=47 // pred_check
          %p2790 = pneg %p212
        $region90: #{tpu_custom_call.1} parent=47 // pred_check_branch
          %2792 = sbr.rel (%p2790) target = $region92
        $region91: #{tpu_custom_call.1} parent=47 // pred_region
          %2793 = dma.done [#allocation4], 1024
        $region92: #{tpu_custom_call.1} parent=47 // pred_fallthru
          _
      $region48: #{tpu_custom_call.1} parent=5 // pred_fallthru
        _
      %p2794 = scmp.le.s32.totalorder 2, %s27
      // Predicated region
      $region93: #{tpu_custom_call.1} parent=5 // pred_check
        %p2795 = pneg %p2794
      $region94: #{tpu_custom_call.1} parent=5 // pred_check_branch
        %2797 = sbr.rel (%p2795) target = $region96
      $region95: #{tpu_custom_call.1} parent=5 // pred_region
        %s2798 = ssub.s32 %s27, 2
        // Predicated region
        $region97: #{tpu_custom_call.1} parent=95 // pred_check
          %p2799 = pneg %p244
        $region98: #{tpu_custom_call.1} parent=95 // pred_check_branch
          %2801 = sbr.rel (%p2799) target = $region100
        $region99: #{tpu_custom_call.1} parent=95 // pred_region
          %s2802 = sand.u32 %s229, 1
          %s2803 = scalar_lea.sflag [#allocation16], %s2802
          %s2804 = sand.u32 %s229, 1
          %s2805 = smul.addr %s2804, 32
          %s2806 = scalar_lea.vmem [#allocation15], %s2805
          %2807 = dma.done %s2803, 512
        $region100: #{tpu_custom_call.1} parent=95 // pred_fallthru
          _
      $region96: #{tpu_custom_call.1} parent=5 // pred_fallthru
        _
    $region6: #{tpu_custom_call.1} parent=1 // loop_footer
      %s31 = sadd.s32 1, %s27
    $region7: #{tpu_custom_call.1} parent=1 // loop_footer_branch
      %26 = sbr.rel target = $region3
    $region8: #{tpu_custom_call.1} parent=1 // loop_exit
      _
    %2808 = vsyncpa [#allocation3], 1
    %s2809 = scalar_lea.sflag [#allocation3], 1
    %2810 = vsyncpa %s2809, 1
    %2811 = vsyncpa [#allocation6], 1
    %2812 = vsyncpa [#allocation9], 1
    %s2813 = scalar_lea.sflag [#allocation9], 1
    %2814 = vsyncpa %s2813, 1
    %2815 = vsyncpa [#allocation12], 1
    %s2816 = scalar_lea.sflag [#allocation12], 1
    %2817 = vsyncpa %s2816, 1
    %2818 = vsyncpa [#allocation4], 1
    %s2819 = scalar_lea.sflag [#allocation4], 1
    %2820 = vsyncpa %s2819, 1
    %2821 = vsyncpa [#allocation16], 1
    %s2822 = scalar_lea.sflag [#allocation16], 1
    %2823 = vsyncpa %s2822, 1

</llo_original>
